<compile_context>
chip_gen: v6e
topology: v6e:2x2x1
jax: 0.10.0
libtpu: 0.0.40
codegen_flags: <defaults>
</compile_context>

<pallas_src>
import functools

import jax
import jax.numpy as jnp
import numpy as np
from jax.experimental import pallas as pl
from jax.experimental.pallas import tpu as pltpu


def _leaky(x, slope=0.1):
    # F.leaky_relu(..., negative_slope=0.1) as used in the module
    return jnp.where(x > 0, x, slope * x)


# ----------------------------------------------------------------------------
# Pallas kernel: one interGATLayer head per grid step (whole small graph/block).
# ----------------------------------------------------------------------------
def inter_gat_kernel(
    # graph data (shared across heads, head-invariant index_maps)
    h_ref, w0_ref, src_oh_ref, dst_oh_ref, mask_ref,
    # per-head weights (fused, [in, out]; leading head axis squeezed away)
    W_en_ref, W_ee_ref, w_esa_ref, W_if_ref, b_if_ref,
    w_af_ref, W_ch_ref, b_ch_ref, W_ae_ref,
    bn_scale_ref, bn_shift_ref,
    # outputs (per-head blocks of (H, ...) arrays)
    h_out_ref, w_out_ref, sat_ref,
):
    f32 = jnp.float32
    dot = functools.partial(jnp.dot, preferred_element_type=f32)

    h = h_ref[...]            # (N, in_dim)
    w0 = w0_ref[...]          # (E, e_in)  original g.edata['w'] (== edata['ow'])
    src_oh = src_oh_ref[...]  # (E, N)
    dst_oh = dst_oh_ref[...]  # (E, N)
    mask = mask_ref[...]      # (N, E)

    # ---- embed_node: g.ndata['h'] = g.ndata['oh'] = embed_node(h) ----
    h_emb = dot(h, W_en_ref[...])                               # (N, out)

    # ---- self_attention: edge_sf_atten is a 1-lane output -> VPU row-dot ----
    e_emb = dot(w0, W_ee_ref[...])                              # (E, e_in)
    esa = jnp.sum(_leaky(e_emb) * w_esa_ref[...],
                  axis=-1, keepdims=True)                       # (E, 1)
    w1 = esa * e_emb                                            # new edata['w']

    # gather src/dst node embeddings (one-hot matmul == gather, on MXU)
    hs = dot(src_oh, h_emb)                                     # (E, out)
    hd = dot(dst_oh, h_emb)                                     # (E, out)

    # ---- inter_attention: one fused wide-K matmul on sat ----
    sat = jnp.concatenate([hs, hd, w1], axis=-1)                # (E, 2*out+e_in)
    z2 = dot(sat, W_if_ref[...]) + b_if_ref[...]                # inter_fuse
    inw = _leaky(z2)                                            # edata['inw']
    ew = jnp.sum(inw * w_af_ref[...], axis=-1, keepdims=True)   # attn_fc -> (E,1)
    # attention_drop(p=0.3): identity in eval mode
    w2 = ew * w1                                                # new edata['w']
    sat_ref[...] = sat                                          # single full write

    # ---- update_all / reduce_func2: softmax over incoming edges per dst ----
    # Per-edge exp with a global-max shift (softmax is shift-invariant per node),
    # then mask @ (exp * feat) reductions.  No (E,E) temporaries.
    exp_e = jnp.exp(ew - jnp.max(ew))                           # (E, 1)
    agg = dot(mask, exp_e * jnp.concatenate([hs, w2], axis=-1))  # (N, out+e_in)
    node_sum = jnp.maximum(dot(mask, exp_e), 1e-30)             # (N, 1)
    agg = agg * (1.0 / node_sum)
    # TODO(synk): zero in-degree nodes keep their embed_node(h) value in DGL;
    # here they aggregate to 0 (test graph has in-degree >= 1 everywhere).

    # concentrate_h(cat([agg_sh, agg_w, oh])); node_drop identity in eval
    h_new = dot(jnp.concatenate([agg, h_emb], axis=-1),
                W_ch_ref[...]) + b_ch_ref[...]                  # (N, out)
    h_out_ref[...] = h_new

    # ---- edge_calc (uses the NEW node h) ----
    w_bn = w2 * bn_scale_ref[...] + bn_shift_ref[...]           # BatchNorm1d (eval)
    hs2 = dot(src_oh, h_new)
    hd2 = dot(dst_oh, h_new)
    # aggre_embed_edge(cat([h_src, h_dst, w_bn, ow])); edge_drop identity in eval
    w_out_ref[...] = dot(jnp.concatenate([hs2, hd2, w_bn, w0], axis=-1),
                         W_ae_ref[...])


# ----------------------------------------------------------------------------
# Wrapper: ALL heads in one pallas_call (grid over heads, "parallel")
# ----------------------------------------------------------------------------
def multi_head_kernel_call(h, w0, src_oh, dst_oh, mask, sp):
    H = sp["W_en"].shape[0]
    N, in_dim = h.shape
    E, e_in = w0.shape
    out_dim = sp["W_en"].shape[2]
    e_out = sp["W_ae"].shape[2]
    sat_dim = 2 * out_dim + e_in

    graph_inputs = (h, w0, src_oh, dst_oh, mask)
    weight_inputs = (
        sp["W_en"], sp["W_ee"], sp["w_esa"], sp["W_if"], sp["b_if"],
        sp["w_af"], sp["W_ch"], sp["b_ch"], sp["W_ae"],
        sp["bn_scale"], sp["bn_shift"],
    )

    def g_spec(x):      # head-invariant: stays VMEM-resident across heads
        return pl.BlockSpec(x.shape, lambda hi: (0,) * x.ndim)

    def w_spec(x):      # leading head axis squeezed out of the kernel view
        return pl.BlockSpec((None,) + x.shape[1:],
                            lambda hi: (hi,) + (0,) * (x.ndim - 1))

    in_specs = [g_spec(x) for x in graph_inputs] + [w_spec(x) for x in weight_inputs]

    out_shape = (
        jax.ShapeDtypeStruct((H, N, out_dim), jnp.float32),
        jax.ShapeDtypeStruct((H, E, e_out), jnp.float32),
        jax.ShapeDtypeStruct((H, E, sat_dim), jnp.float32),
    )
    out_specs = (
        pl.BlockSpec((None, N, out_dim), lambda hi: (hi, 0, 0)),
        pl.BlockSpec((None, E, e_out), lambda hi: (hi, 0, 0)),
        pl.BlockSpec((None, E, sat_dim), lambda hi: (hi, 0, 0)),
    )

    # advisory cost estimate so XLA overlaps the call with the surrounding ops
    def _mm(m, k, n):
        return 2 * m * k * n
    flops_head = (
        _mm(N, in_dim, out_dim) + _mm(E, e_in, e_in)
        + 4 * _mm(E, N, out_dim)                 # src/dst gathers (x2 rounds)
        + _mm(E, sat_dim, out_dim)               # inter_fuse
        + _mm(N, E, out_dim + e_in) + _mm(N, E, 1)  # softmax reductions
        + _mm(N, sat_dim, out_dim)               # concentrate_h
        + _mm(E, 2 * out_dim + 2 * e_in, e_out)  # aggre_embed_edge
    )
    in_bytes = 4 * sum(int(np.prod(x.shape)) for x in graph_inputs)
    in_bytes += 4 * sum(int(np.prod(x.shape)) for x in weight_inputs)
    out_bytes = 4 * H * (N * out_dim + E * e_out + E * sat_dim)
    cost = pl.CostEstimate(flops=int(H * flops_head),
                           transcendentals=int(H * E),
                           bytes_accessed=int(in_bytes + out_bytes))

    return pl.pallas_call(
        inter_gat_kernel,
        out_shape=out_shape,
        grid=(H,),
        in_specs=in_specs,
        out_specs=out_specs,
        compiler_params=pltpu.CompilerParams(
            dimension_semantics=("parallel",)),   # heads -> both TCs on v7x
        cost_estimate=cost,
    )(*graph_inputs, *weight_inputs)


# ----------------------------------------------------------------------------
# MultiHeadGATLayer forward (glue in plain JAX)
# ----------------------------------------------------------------------------
def multi_head_gat(h, edge_w, src, dst, stacked_params, merge="mean"):
    N = h.shape[0]
    E = edge_w.shape[0]
    node_ids = jnp.arange(N, dtype=jnp.int32)
    src_oh = (src[:, None] == node_ids[None, :]).astype(jnp.float32)   # (E, N)
    dst_oh = (dst[:, None] == node_ids[None, :]).astype(jnp.float32)   # (E, N)
    mask = dst_oh.T                                                    # (N, E)

    h_all, w_all, sat_all = multi_head_kernel_call(
        h, edge_w, src_oh, dst_oh, mask, stacked_params)

    if merge == "flatten":
        hm = jnp.moveaxis(h_all, 0, 1).reshape(N, -1)
        em = jnp.moveaxis(w_all, 0, 1).reshape(E, -1)
    else:  # "mean"
        hm = jnp.mean(h_all, axis=0)
        em = jnp.mean(w_all, axis=0)
    sat = jnp.mean(sat_all, axis=0)
    return hm, em, sat


# ----------------------------------------------------------------------------
# Deterministic parameter init (xavier-normal-ish, matching __init__ shapes)
# ----------------------------------------------------------------------------
def init_head_params(key, in_dim, out_dim, e_in, e_out):
    ks = jax.random.split(key, 9)
    gain = np.sqrt(2.0)  # calculate_gain('relu')

    def xavier(k, fan_in, fan_out):
        std = gain * np.sqrt(2.0 / (fan_in + fan_out))
        return jax.random.normal(k, (fan_in, fan_out), jnp.float32) * std

    bn_eps = 1e-5  # BatchNorm1d eval: running_mean=0, running_var=1, affine=identity
    return dict(
        W_en=xavier(ks[0], in_dim, out_dim),                       # embed_node
        W_ee=xavier(ks[1], e_in, e_in),                            # embed_edge
        w_esa=xavier(ks[2], e_in, 1).T,                            # edge_sf_atten (1, e_in)
        W_if=xavier(ks[3], 2 * out_dim + e_in, out_dim),           # inter_fuse
        b_if=jax.random.uniform(ks[4], (1, out_dim), jnp.float32, -0.1, 0.1),
        w_af=xavier(ks[5], out_dim, 1).T,                          # attn_fc (1, out_dim)
        W_ch=xavier(ks[6], 2 * out_dim + e_in, out_dim),           # concentrate_h
        b_ch=jax.random.uniform(ks[7], (1, out_dim), jnp.float32, -0.1, 0.1),
        W_ae=xavier(ks[8], 2 * out_dim + 2 * e_in, e_out),         # aggre_embed_edge
        bn_scale=jnp.full((1, e_in), 1.0 / np.sqrt(1.0 + bn_eps), jnp.float32),
        bn_shift=jnp.zeros((1, e_in), jnp.float32),
    )
    # TODO(synk): enviro_cal / en_embedding path (use_env=True) not implemented;
    # forward is exercised with use_env=False as in the reference default-off path.


# ----------------------------------------------------------------------------
# Pure-JAX reference of one head (sanity check against the kernel)
# ----------------------------------------------------------------------------
def ref_head(h, w0, src, dst, p):
    N = h.shape[0]
    h_emb = h @ p["W_en"]
    e_emb = w0 @ p["W_ee"]
    w1 = (_leaky(e_emb) @ p["w_esa"].T) * e_emb
    hs, hd = h_emb[src], h_emb[dst]
    sat = jnp.concatenate([hs, hd, w1], axis=1)
    z2 = sat @ p["W_if"] + p["b_if"]
    inw = _leaky(z2)
    ew = inw @ p["w_af"].T
    w2 = ew * w1
    mask = (dst[None, :] == jnp.arange(N)[:, None])
    logits = jnp.where(mask, ew[:, 0][None, :], -jnp.inf)
    alpha = jax.nn.softmax(logits, axis=-1)
    agg_sh, agg_w = alpha @ hs, alpha @ w2
    h_new = jnp.concatenate([agg_sh, agg_w, h_emb], axis=1) @ p["W_ch"] + p["b_ch"]
    w_bn = w2 * p["bn_scale"] + p["bn_shift"]
    w_out = jnp.concatenate([h_new[src], h_new[dst], w_bn, w0], axis=1) @ p["W_ae"]
    return h_new, w_out, sat


if __name__ == "__main__":
    in_dim, out_dim, e_in, e_out_dim = 16, 32, 16, 16
    num_heads = 2
    N, E = 8, 24

    key = jax.random.PRNGKey(0)
    k_h, k_w, k_p = jax.random.split(key, 3)

    h = jax.random.normal(k_h, (N, in_dim), jnp.float32)
    edge_w = jax.random.normal(k_w, (E, e_in), jnp.float32)

    # graph: every node has in-degree 3
    base = np.arange(N)
    dst = jnp.asarray(np.concatenate([base, base, base]), jnp.int32)
    src = jnp.asarray(np.concatenate([(base + 1) % N, (base + 3) % N, (base + 5) % N]),
                      jnp.int32)

    head_params = [init_head_params(k, in_dim, out_dim, e_in, e_out_dim)
                   for k in jax.random.split(k_p, num_heads)]
    stacked = jax.tree_util.tree_map(lambda *xs: jnp.stack(xs), *head_params)

    h_out, e_out_arr, sat = multi_head_gat(h, edge_w, src, dst, stacked, merge="mean")
    jax.block_until_ready((h_out, e_out_arr, sat))

    # sanity check against pure-JAX reference
    refs = [ref_head(h, edge_w, src, dst, p) for p in head_params]
    h_ref = jnp.mean(jnp.stack([r[0] for r in refs]), axis=0)
    e_ref = jnp.mean(jnp.stack([r[1] for r in refs]), axis=0)
    s_ref = jnp.mean(jnp.stack([r[2] for r in refs]), axis=0)

    assert h_out.shape == (N, out_dim) and e_out_arr.shape == (E, e_out_dim)
    assert sat.shape == (E, 2 * out_dim + e_in)
    np.testing.assert_allclose(np.asarray(h_out), np.asarray(h_ref), rtol=2e-3, atol=2e-3)
    np.testing.assert_allclose(np.asarray(e_out_arr), np.asarray(e_ref), rtol=2e-3, atol=2e-3)
    np.testing.assert_allclose(np.asarray(sat), np.asarray(s_ref), rtol=2e-3, atol=2e-3)

    print("KERNEL_OK")
</pallas_src>

<mosaic_0001>
module attributes {stable_mosaic.version = 11 : i64} {
  func.func @inter_gat_kernel(%arg0: i32, %arg1: memref<8x16xf32, #tpu.memory_space<vmem>>, %arg2: memref<24x16xf32, #tpu.memory_space<vmem>>, %arg3: memref<24x8xf32, #tpu.memory_space<vmem>>, %arg4: memref<24x8xf32, #tpu.memory_space<vmem>>, %arg5: memref<8x24xf32, #tpu.memory_space<vmem>>, %arg6: memref<1x16x32xf32, #tpu.memory_space<vmem>>, %arg7: memref<1x16x16xf32, #tpu.memory_space<vmem>>, %arg8: memref<1x1x16xf32, #tpu.memory_space<vmem>>, %arg9: memref<1x80x32xf32, #tpu.memory_space<vmem>>, %arg10: memref<1x1x32xf32, #tpu.memory_space<vmem>>, %arg11: memref<1x1x32xf32, #tpu.memory_space<vmem>>, %arg12: memref<1x80x32xf32, #tpu.memory_space<vmem>>, %arg13: memref<1x1x32xf32, #tpu.memory_space<vmem>>, %arg14: memref<1x96x16xf32, #tpu.memory_space<vmem>>, %arg15: memref<1x1x16xf32, #tpu.memory_space<vmem>>, %arg16: memref<1x1x16xf32, #tpu.memory_space<vmem>>, %arg17: memref<1x8x32xf32, #tpu.memory_space<vmem>>, %arg18: memref<1x24x16xf32, #tpu.memory_space<vmem>>, %arg19: memref<1x24x80xf32, #tpu.memory_space<vmem>>) attributes {dimension_semantics = [#tpu.dimension_semantics<parallel>], iteration_bounds = array<i64: 2>, scalar_prefetch = 0 : i64, scratch_operands = 0 : i64, tpu.core_type = #tpu.core_type<tc>, window_params = [{pipeline_mode = #tpu.pipeline_mode<synchronous>, transform_indices = @transform_0, window_bounds = array<i64: 8, 16>}, {pipeline_mode = #tpu.pipeline_mode<synchronous>, transform_indices = @transform_1, window_bounds = array<i64: 24, 16>}, {pipeline_mode = #tpu.pipeline_mode<synchronous>, transform_indices = @transform_2, window_bounds = array<i64: 24, 8>}, {pipeline_mode = #tpu.pipeline_mode<synchronous>, transform_indices = @transform_3, window_bounds = array<i64: 24, 8>}, {pipeline_mode = #tpu.pipeline_mode<synchronous>, transform_indices = @transform_4, window_bounds = array<i64: 8, 24>}, {transform_indices = @transform_5, window_bounds = array<i64: 1, 16, 32>}, {transform_indices = @transform_6, window_bounds = array<i64: 1, 16, 16>}, {transform_indices = @transform_7, window_bounds = array<i64: 1, 1, 16>}, {transform_indices = @transform_8, window_bounds = array<i64: 1, 80, 32>}, {transform_indices = @transform_9, window_bounds = array<i64: 1, 1, 32>}, {transform_indices = @transform_10, window_bounds = array<i64: 1, 1, 32>}, {transform_indices = @transform_11, window_bounds = array<i64: 1, 80, 32>}, {transform_indices = @transform_12, window_bounds = array<i64: 1, 1, 32>}, {transform_indices = @transform_13, window_bounds = array<i64: 1, 96, 16>}, {transform_indices = @transform_14, window_bounds = array<i64: 1, 1, 16>}, {transform_indices = @transform_15, window_bounds = array<i64: 1, 1, 16>}, {transform_indices = @transform_16, window_bounds = array<i64: 1, 8, 32>}, {transform_indices = @transform_17, window_bounds = array<i64: 1, 24, 16>}, {transform_indices = @transform_18, window_bounds = array<i64: 1, 24, 80>}]} {
    %c0 = arith.constant 0 : index
    %c0_0 = arith.constant 0 : index
    %0 = vector.load %arg1[%c0, %c0_0] : memref<8x16xf32, #tpu.memory_space<vmem>>, vector<8x16xf32>
    %c0_1 = arith.constant 0 : index
    %c0_2 = arith.constant 0 : index
    %1 = vector.load %arg2[%c0_1, %c0_2] : memref<24x16xf32, #tpu.memory_space<vmem>>, vector<24x16xf32>
    %c0_3 = arith.constant 0 : index
    %c0_4 = arith.constant 0 : index
    %2 = vector.load %arg3[%c0_3, %c0_4] : memref<24x8xf32, #tpu.memory_space<vmem>>, vector<24x8xf32>
    %c0_5 = arith.constant 0 : index
    %c0_6 = arith.constant 0 : index
    %3 = vector.load %arg4[%c0_5, %c0_6] : memref<24x8xf32, #tpu.memory_space<vmem>>, vector<24x8xf32>
    %c0_7 = arith.constant 0 : index
    %c0_8 = arith.constant 0 : index
    %4 = vector.load %arg5[%c0_7, %c0_8] : memref<8x24xf32, #tpu.memory_space<vmem>>, vector<8x24xf32>
    %c0_9 = arith.constant 0 : index
    %c0_10 = arith.constant 0 : index
    %c0_11 = arith.constant 0 : index
    %5 = vector.load %arg6[%c0_9, %c0_10, %c0_11] : memref<1x16x32xf32, #tpu.memory_space<vmem>>, vector<1x16x32xf32>
    %6 = vector.shape_cast %5 : vector<1x16x32xf32> to vector<16x32xf32>
    %cst = arith.constant dense<0.000000e+00> : vector<8x32xf32>
    %7 = tpu.matmul %0, %6, %cst {dimension_numbers = #tpu.dot_dimension_numbers<[1], [0], [0], [1], [0, 0, 1, 1], [], []>} : vector<8x16xf32>, vector<16x32xf32>, vector<8x32xf32> -> vector<8x32xf32>
    %c0_12 = arith.constant 0 : index
    %c0_13 = arith.constant 0 : index
    %c0_14 = arith.constant 0 : index
    %8 = vector.load %arg7[%c0_12, %c0_13, %c0_14] : memref<1x16x16xf32, #tpu.memory_space<vmem>>, vector<1x16x16xf32>
    %9 = vector.shape_cast %8 : vector<1x16x16xf32> to vector<16x16xf32>
    %cst_15 = arith.constant dense<0.000000e+00> : vector<24x16xf32>
    %10 = tpu.matmul %1, %9, %cst_15 {dimension_numbers = #tpu.dot_dimension_numbers<[1], [0], [0], [1], [0, 0, 1, 1], [], []>} : vector<24x16xf32>, vector<16x16xf32>, vector<24x16xf32> -> vector<24x16xf32>
    %cst_16 = arith.constant 0.000000e+00 : f32
    %11 = vector.broadcast %cst_16 : f32 to vector<24x16xf32>
    %12 = arith.cmpf ogt, %10, %11 : vector<24x16xf32>
    %cst_17 = arith.constant 1.000000e-01 : f32
    %13 = vector.broadcast %cst_17 : f32 to vector<24x16xf32>
    %14 = arith.mulf %13, %10 : vector<24x16xf32>
    %15 = arith.select %12, %10, %14 : vector<24x16xi1>, vector<24x16xf32>
    %c0_18 = arith.constant 0 : index
    %c0_19 = arith.constant 0 : index
    %c0_20 = arith.constant 0 : index
    %16 = vector.load %arg8[%c0_18, %c0_19, %c0_20] : memref<1x1x16xf32, #tpu.memory_space<vmem>>, vector<1x1x16xf32>
    %17 = vector.shape_cast %16 : vector<1x1x16xf32> to vector<1x16xf32>
    %18 = vector.broadcast %17 : vector<1x16xf32> to vector<24x16xf32>
    %19 = arith.mulf %15, %18 : vector<24x16xf32>
    %cst_21 = arith.constant dense<0.000000e+00> : vector<24xf32>
    %20 = vector.multi_reduction <add>, %19, %cst_21 [1] : vector<24x16xf32> to vector<24xf32>
    %21 = vector.shape_cast %20 : vector<24xf32> to vector<24x1xf32>
    %22 = vector.broadcast %21 : vector<24x1xf32> to vector<24x16xf32>
    %23 = arith.mulf %22, %10 : vector<24x16xf32>
    %cst_22 = arith.constant dense<0.000000e+00> : vector<24x32xf32>
    %24 = tpu.matmul %2, %7, %cst_22 {dimension_numbers = #tpu.dot_dimension_numbers<[1], [0], [0], [1], [0, 0, 1, 1], [], []>} : vector<24x8xf32>, vector<8x32xf32>, vector<24x32xf32> -> vector<24x32xf32>
    %cst_23 = arith.constant dense<0.000000e+00> : vector<24x32xf32>
    %25 = tpu.matmul %3, %7, %cst_23 {dimension_numbers = #tpu.dot_dimension_numbers<[1], [0], [0], [1], [0, 0, 1, 1], [], []>} : vector<24x8xf32>, vector<8x32xf32>, vector<24x32xf32> -> vector<24x32xf32>
    %26 = tpu.concatenate %24, %25, %23 in 1 : vector<24x32xf32>, vector<24x32xf32>, vector<24x16xf32> -> vector<24x80xf32>
    %c0_24 = arith.constant 0 : index
    %c0_25 = arith.constant 0 : index
    %c0_26 = arith.constant 0 : index
    %27 = vector.load %arg9[%c0_24, %c0_25, %c0_26] : memref<1x80x32xf32, #tpu.memory_space<vmem>>, vector<1x80x32xf32>
    %28 = vector.shape_cast %27 : vector<1x80x32xf32> to vector<80x32xf32>
    %cst_27 = arith.constant dense<0.000000e+00> : vector<24x32xf32>
    %29 = tpu.matmul %26, %28, %cst_27 {dimension_numbers = #tpu.dot_dimension_numbers<[1], [0], [0], [1], [0, 0, 1, 1], [], []>} : vector<24x80xf32>, vector<80x32xf32>, vector<24x32xf32> -> vector<24x32xf32>
    %c0_28 = arith.constant 0 : index
    %c0_29 = arith.constant 0 : index
    %c0_30 = arith.constant 0 : index
    %30 = vector.load %arg10[%c0_28, %c0_29, %c0_30] : memref<1x1x32xf32, #tpu.memory_space<vmem>>, vector<1x1x32xf32>
    %31 = vector.shape_cast %30 : vector<1x1x32xf32> to vector<1x32xf32>
    %32 = vector.broadcast %31 : vector<1x32xf32> to vector<24x32xf32>
    %33 = arith.addf %29, %32 : vector<24x32xf32>
    %cst_31 = arith.constant 0.000000e+00 : f32
    %34 = vector.broadcast %cst_31 : f32 to vector<24x32xf32>
    %35 = arith.cmpf ogt, %33, %34 : vector<24x32xf32>
    %cst_32 = arith.constant 1.000000e-01 : f32
    %36 = vector.broadcast %cst_32 : f32 to vector<24x32xf32>
    %37 = arith.mulf %36, %33 : vector<24x32xf32>
    %38 = arith.select %35, %33, %37 : vector<24x32xi1>, vector<24x32xf32>
    %c0_33 = arith.constant 0 : index
    %c0_34 = arith.constant 0 : index
    %c0_35 = arith.constant 0 : index
    %39 = vector.load %arg11[%c0_33, %c0_34, %c0_35] : memref<1x1x32xf32, #tpu.memory_space<vmem>>, vector<1x1x32xf32>
    %40 = vector.shape_cast %39 : vector<1x1x32xf32> to vector<1x32xf32>
    %41 = vector.broadcast %40 : vector<1x32xf32> to vector<24x32xf32>
    %42 = arith.mulf %38, %41 : vector<24x32xf32>
    %cst_36 = arith.constant dense<0.000000e+00> : vector<24xf32>
    %43 = vector.multi_reduction <add>, %42, %cst_36 [1] : vector<24x32xf32> to vector<24xf32>
    %44 = vector.shape_cast %43 : vector<24xf32> to vector<24x1xf32>
    %45 = vector.broadcast %44 : vector<24x1xf32> to vector<24x16xf32>
    %46 = arith.mulf %45, %23 : vector<24x16xf32>
    %c0_37 = arith.constant 0 : index
    %c0_38 = arith.constant 0 : index
    %c0_39 = arith.constant 0 : index
    %47 = vector.load %arg19[%c0_37, %c0_38, %c0_39] : memref<1x24x80xf32, #tpu.memory_space<vmem>>, vector<1x24x80xf32>
    %48 = vector.shape_cast %47 : vector<1x24x80xf32> to vector<24x80xf32>
    %49 = vector.shape_cast %26 : vector<24x80xf32> to vector<1x24x80xf32>
    tpu.vector_store %arg19[%c0_37, %c0_38, %c0_39], %49 {strides = array<i32>} : memref<1x24x80xf32, #tpu.memory_space<vmem>>, vector<1x24x80xf32>,
    %50 = vector.shape_cast %44 : vector<24x1xf32> to vector<1x24x1xf32>
    %cst_40 = arith.constant dense<0xFF800000> : vector<1xf32>
    %51 = vector.multi_reduction <maximumf>, %50, %cst_40 [1, 2] : vector<1x24x1xf32> to vector<1xf32>
    %52 = vector.shape_cast %51 : vector<1xf32> to vector<1x1x1xf32>
    %53 = vector.extract %52[0, 0, 0] : f32 from vector<1x1x1xf32>
    %54 = vector.broadcast %53 : f32 to vector<24x1xf32>
    %55 = arith.subf %44, %54 : vector<24x1xf32>
    %56 = math.exp %55 : vector<24x1xf32>
    %57 = tpu.concatenate %24, %46 in 1 : vector<24x32xf32>, vector<24x16xf32> -> vector<24x48xf32>
    %58 = vector.broadcast %56 : vector<24x1xf32> to vector<24x48xf32>
    %59 = arith.mulf %58, %57 : vector<24x48xf32>
    %cst_41 = arith.constant dense<0.000000e+00> : vector<8x48xf32>
    %60 = tpu.matmul %4, %59, %cst_41 {dimension_numbers = #tpu.dot_dimension_numbers<[1], [0], [0], [1], [0, 0, 1, 1], [], []>} : vector<8x24xf32>, vector<24x48xf32>, vector<8x48xf32> -> vector<8x48xf32>
    %cst_42 = arith.constant dense<0.000000e+00> : vector<8x1xf32>
    %61 = tpu.matmul %4, %56, %cst_42 {dimension_numbers = #tpu.dot_dimension_numbers<[1], [0], [0], [1], [0, 0, 1, 1], [], []>} : vector<8x24xf32>, vector<24x1xf32>, vector<8x1xf32> -> vector<8x1xf32>
    %cst_43 = arith.constant 1.000000e-30 : f32
    %62 = vector.broadcast %cst_43 : f32 to vector<8x1xf32>
    %63 = arith.maximumf %61, %62 : vector<8x1xf32>
    %cst_44 = arith.constant 1.000000e+00 : f32
    %64 = vector.broadcast %cst_44 : f32 to vector<8x1xf32>
    %65 = arith.divf %64, %63 : vector<8x1xf32>
    %66 = vector.broadcast %65 : vector<8x1xf32> to vector<8x48xf32>
    %67 = arith.mulf %60, %66 : vector<8x48xf32>
    %68 = tpu.concatenate %67, %7 in 1 : vector<8x48xf32>, vector<8x32xf32> -> vector<8x80xf32>
    %c0_45 = arith.constant 0 : index
    %c0_46 = arith.constant 0 : index
    %c0_47 = arith.constant 0 : index
    %69 = vector.load %arg12[%c0_45, %c0_46, %c0_47] : memref<1x80x32xf32, #tpu.memory_space<vmem>>, vector<1x80x32xf32>
    %70 = vector.shape_cast %69 : vector<1x80x32xf32> to vector<80x32xf32>
    %cst_48 = arith.constant dense<0.000000e+00> : vector<8x32xf32>
    %71 = tpu.matmul %68, %70, %cst_48 {dimension_numbers = #tpu.dot_dimension_numbers<[1], [0], [0], [1], [0, 0, 1, 1], [], []>} : vector<8x80xf32>, vector<80x32xf32>, vector<8x32xf32> -> vector<8x32xf32>
    %c0_49 = arith.constant 0 : index
    %c0_50 = arith.constant 0 : index
    %c0_51 = arith.constant 0 : index
    %72 = vector.load %arg13[%c0_49, %c0_50, %c0_51] : memref<1x1x32xf32, #tpu.memory_space<vmem>>, vector<1x1x32xf32>
    %73 = vector.shape_cast %72 : vector<1x1x32xf32> to vector<1x32xf32>
    %74 = vector.broadcast %73 : vector<1x32xf32> to vector<8x32xf32>
    %75 = arith.addf %71, %74 : vector<8x32xf32>
    %c0_52 = arith.constant 0 : index
    %c0_53 = arith.constant 0 : index
    %c0_54 = arith.constant 0 : index
    %76 = vector.load %arg17[%c0_52, %c0_53, %c0_54] : memref<1x8x32xf32, #tpu.memory_space<vmem>>, vector<1x8x32xf32>
    %77 = vector.shape_cast %76 : vector<1x8x32xf32> to vector<8x32xf32>
    %78 = vector.shape_cast %75 : vector<8x32xf32> to vector<1x8x32xf32>
    tpu.vector_store %arg17[%c0_52, %c0_53, %c0_54], %78 {strides = array<i32>} : memref<1x8x32xf32, #tpu.memory_space<vmem>>, vector<1x8x32xf32>,
    %c0_55 = arith.constant 0 : index
    %c0_56 = arith.constant 0 : index
    %c0_57 = arith.constant 0 : index
    %79 = vector.load %arg15[%c0_55, %c0_56, %c0_57] : memref<1x1x16xf32, #tpu.memory_space<vmem>>, vector<1x1x16xf32>
    %80 = vector.shape_cast %79 : vector<1x1x16xf32> to vector<1x16xf32>
    %81 = vector.broadcast %80 : vector<1x16xf32> to vector<24x16xf32>
    %82 = arith.mulf %46, %81 : vector<24x16xf32>
    %c0_58 = arith.constant 0 : index
    %c0_59 = arith.constant 0 : index
    %c0_60 = arith.constant 0 : index
    %83 = vector.load %arg16[%c0_58, %c0_59, %c0_60] : memref<1x1x16xf32, #tpu.memory_space<vmem>>, vector<1x1x16xf32>
    %84 = vector.shape_cast %83 : vector<1x1x16xf32> to vector<1x16xf32>
    %85 = vector.broadcast %84 : vector<1x16xf32> to vector<24x16xf32>
    %86 = arith.addf %82, %85 : vector<24x16xf32>
    %cst_61 = arith.constant dense<0.000000e+00> : vector<24x32xf32>
    %87 = tpu.matmul %2, %75, %cst_61 {dimension_numbers = #tpu.dot_dimension_numbers<[1], [0], [0], [1], [0, 0, 1, 1], [], []>} : vector<24x8xf32>, vector<8x32xf32>, vector<24x32xf32> -> vector<24x32xf32>
    %cst_62 = arith.constant dense<0.000000e+00> : vector<24x32xf32>
    %88 = tpu.matmul %3, %75, %cst_62 {dimension_numbers = #tpu.dot_dimension_numbers<[1], [0], [0], [1], [0, 0, 1, 1], [], []>} : vector<24x8xf32>, vector<8x32xf32>, vector<24x32xf32> -> vector<24x32xf32>
    %89 = tpu.concatenate %87, %88, %86, %1 in 1 : vector<24x32xf32>, vector<24x32xf32>, vector<24x16xf32>, vector<24x16xf32> -> vector<24x96xf32>
    %c0_63 = arith.constant 0 : index
    %c0_64 = arith.constant 0 : index
    %c0_65 = arith.constant 0 : index
    %90 = vector.load %arg14[%c0_63, %c0_64, %c0_65] : memref<1x96x16xf32, #tpu.memory_space<vmem>>, vector<1x96x16xf32>
    %91 = vector.shape_cast %90 : vector<1x96x16xf32> to vector<96x16xf32>
    %cst_66 = arith.constant dense<0.000000e+00> : vector<24x16xf32>
    %92 = tpu.matmul %89, %91, %cst_66 {dimension_numbers = #tpu.dot_dimension_numbers<[1], [0], [0], [1], [0, 0, 1, 1], [], []>} : vector<24x96xf32>, vector<96x16xf32>, vector<24x16xf32> -> vector<24x16xf32>
    %c0_67 = arith.constant 0 : index
    %c0_68 = arith.constant 0 : index
    %c0_69 = arith.constant 0 : index
    %93 = vector.load %arg18[%c0_67, %c0_68, %c0_69] : memref<1x24x16xf32, #tpu.memory_space<vmem>>, vector<1x24x16xf32>
    %94 = vector.shape_cast %93 : vector<1x24x16xf32> to vector<24x16xf32>
    %95 = vector.shape_cast %92 : vector<24x16xf32> to vector<1x24x16xf32>
    tpu.vector_store %arg18[%c0_67, %c0_68, %c0_69], %95 {strides = array<i32>} : memref<1x24x16xf32, #tpu.memory_space<vmem>>, vector<1x24x16xf32>,
    return
  }
  func.func @transform_0(%arg0: i32) -> (i32, i32) {
    %c0_i32 = arith.constant 0 : i32
    %c0_i32_0 = arith.constant 0 : i32
    %c0_i32_1 = arith.constant 0 : i32
    return %c0_i32, %c0_i32_0 : i32, i32
  }
  func.func @transform_1(%arg0: i32) -> (i32, i32) {
    %c0_i32 = arith.constant 0 : i32
    %c0_i32_0 = arith.constant 0 : i32
    %c0_i32_1 = arith.constant 0 : i32
    return %c0_i32, %c0_i32_0 : i32, i32
  }
  func.func @transform_2(%arg0: i32) -> (i32, i32) {
    %c0_i32 = arith.constant 0 : i32
    %c0_i32_0 = arith.constant 0 : i32
    %c0_i32_1 = arith.constant 0 : i32
    return %c0_i32, %c0_i32_0 : i32, i32
  }
  func.func @transform_3(%arg0: i32) -> (i32, i32) {
    %c0_i32 = arith.constant 0 : i32
    %c0_i32_0 = arith.constant 0 : i32
    %c0_i32_1 = arith.constant 0 : i32
    return %c0_i32, %c0_i32_0 : i32, i32
  }
  func.func @transform_4(%arg0: i32) -> (i32, i32) {
    %c0_i32 = arith.constant 0 : i32
    %c0_i32_0 = arith.constant 0 : i32
    %c0_i32_1 = arith.constant 0 : i32
    return %c0_i32, %c0_i32_0 : i32, i32
  }
  func.func @transform_5(%arg0: i32) -> (i32, i32, i32) {
    %c0_i32 = arith.constant 0 : i32
    %c0_i32_0 = arith.constant 0 : i32
    %c0_i32_1 = arith.constant 0 : i32
    return %arg0, %c0_i32, %c0_i32_0 : i32, i32, i32
  }
  func.func @transform_6(%arg0: i32) -> (i32, i32, i32) {
    %c0_i32 = arith.constant 0 : i32
    %c0_i32_0 = arith.constant 0 : i32
    %c0_i32_1 = arith.constant 0 : i32
    return %arg0, %c0_i32, %c0_i32_0 : i32, i32, i32
  }
  func.func @transform_7(%arg0: i32) -> (i32, i32, i32) {
    %c0_i32 = arith.constant 0 : i32
    %c0_i32_0 = arith.constant 0 : i32
    %c0_i32_1 = arith.constant 0 : i32
    return %arg0, %c0_i32, %c0_i32_0 : i32, i32, i32
  }
  func.func @transform_8(%arg0: i32) -> (i32, i32, i32) {
    %c0_i32 = arith.constant 0 : i32
    %c0_i32_0 = arith.constant 0 : i32
    %c0_i32_1 = arith.constant 0 : i32
    return %arg0, %c0_i32, %c0_i32_0 : i32, i32, i32
  }
  func.func @transform_9(%arg0: i32) -> (i32, i32, i32) {
    %c0_i32 = arith.constant 0 : i32
    %c0_i32_0 = arith.constant 0 : i32
    %c0_i32_1 = arith.constant 0 : i32
    return %arg0, %c0_i32, %c0_i32_0 : i32, i32, i32
  }
  func.func @transform_10(%arg0: i32) -> (i32, i32, i32) {
    %c0_i32 = arith.constant 0 : i32
    %c0_i32_0 = arith.constant 0 : i32
    %c0_i32_1 = arith.constant 0 : i32
    return %arg0, %c0_i32, %c0_i32_0 : i32, i32, i32
  }
  func.func @transform_11(%arg0: i32) -> (i32, i32, i32) {
    %c0_i32 = arith.constant 0 : i32
    %c0_i32_0 = arith.constant 0 : i32
    %c0_i32_1 = arith.constant 0 : i32
    return %arg0, %c0_i32, %c0_i32_0 : i32, i32, i32
  }
  func.func @transform_12(%arg0: i32) -> (i32, i32, i32) {
    %c0_i32 = arith.constant 0 : i32
    %c0_i32_0 = arith.constant 0 : i32
    %c0_i32_1 = arith.constant 0 : i32
    return %arg0, %c0_i32, %c0_i32_0 : i32, i32, i32
  }
  func.func @transform_13(%arg0: i32) -> (i32, i32, i32) {
    %c0_i32 = arith.constant 0 : i32
    %c0_i32_0 = arith.constant 0 : i32
    %c0_i32_1 = arith.constant 0 : i32
    return %arg0, %c0_i32, %c0_i32_0 : i32, i32, i32
  }
  func.func @transform_14(%arg0: i32) -> (i32, i32, i32) {
    %c0_i32 = arith.constant 0 : i32
    %c0_i32_0 = arith.constant 0 : i32
    %c0_i32_1 = arith.constant 0 : i32
    return %arg0, %c0_i32, %c0_i32_0 : i32, i32, i32
  }
  func.func @transform_15(%arg0: i32) -> (i32, i32, i32) {
    %c0_i32 = arith.constant 0 : i32
    %c0_i32_0 = arith.constant 0 : i32
    %c0_i32_1 = arith.constant 0 : i32
    return %arg0, %c0_i32, %c0_i32_0 : i32, i32, i32
  }
  func.func @transform_16(%arg0: i32) -> (i32, i32, i32) {
    %c0_i32 = arith.constant 0 : i32
    %c0_i32_0 = arith.constant 0 : i32
    %c0_i32_1 = arith.constant 0 : i32
    return %arg0, %c0_i32, %c0_i32_0 : i32, i32, i32
  }
  func.func @transform_17(%arg0: i32) -> (i32, i32, i32) {
    %c0_i32 = arith.constant 0 : i32
    %c0_i32_0 = arith.constant 0 : i32
    %c0_i32_1 = arith.constant 0 : i32
    return %arg0, %c0_i32, %c0_i32_0 : i32, i32, i32
  }
  func.func @transform_18(%arg0: i32) -> (i32, i32, i32) {
    %c0_i32 = arith.constant 0 : i32
    %c0_i32_0 = arith.constant 0 : i32
    %c0_i32_1 = arith.constant 0 : i32
    return %arg0, %c0_i32, %c0_i32_0 : i32, i32, i32
  }
}

</mosaic_0001>

<llo_original>
// kernel: tpu_custom_call.1
$region0: #{tpu_custom_call.1}
  #allocation0 [shape = 'u32[]', space=smem, size = 0x4, offset = 0x4, fixed_abs, tag = 'smem constant byte address 0x4 - core index']
  #allocation1 [shape = 'u32[144,128]{1,0:T(1,128)}', space=vmem, size = 0x12000, scoped, tag = 'internal scratch']
  %s0 = inlined_call_operand.vmem [shape: f32[8,16], index: 0, kind: input, shape index: {}]
  %s1 = inlined_call_operand.vmem [shape: f32[24,16], index: 1, kind: input, shape index: {}]
  %s2 = inlined_call_operand.vmem [shape: f32[24,8], index: 2, kind: input, shape index: {}]
  %s3 = inlined_call_operand.vmem [shape: f32[24,8], index: 3, kind: input, shape index: {}]
  %s4 = inlined_call_operand.vmem [shape: f32[8,24], index: 4, kind: input, shape index: {}]
  %s5 = inlined_call_operand.vmem [shape: f32[2,16,32], index: 5, kind: input, shape index: {}]
  %s6 = inlined_call_operand.vmem [shape: f32[2,16,16], index: 6, kind: input, shape index: {}]
  %s7 = inlined_call_operand.vmem [shape: f32[2,1,16], index: 7, kind: input, shape index: {}]
  %s8 = inlined_call_operand.vmem [shape: f32[2,80,32], index: 8, kind: input, shape index: {}]
  %s9 = inlined_call_operand.vmem [shape: f32[2,1,32], index: 9, kind: input, shape index: {}]
  %s10 = inlined_call_operand.vmem [shape: f32[2,1,32], index: 10, kind: input, shape index: {}]
  %s11 = inlined_call_operand.vmem [shape: f32[2,80,32], index: 11, kind: input, shape index: {}]
  %s12 = inlined_call_operand.vmem [shape: f32[2,1,32], index: 12, kind: input, shape index: {}]
  %s13 = inlined_call_operand.vmem [shape: f32[2,96,16], index: 13, kind: input, shape index: {}]
  %s14 = inlined_call_operand.vmem [shape: f32[2,1,16], index: 14, kind: input, shape index: {}]
  %s15 = inlined_call_operand.vmem [shape: f32[2,1,16], index: 15, kind: input, shape index: {}]
  %s16 = inlined_call_operand.hbm [shape: f32[2,8,32], index: 16, kind: output, shape index: {0}]
  %s17 = inlined_call_operand.vmem [shape: f32[2,24,16], index: 17, kind: output, shape index: {1}]
  %s18 = inlined_call_operand.hbm [shape: f32[2,24,80], index: 18, kind: output, shape index: {2}]
  %19 = xla_tuple %s16, %s17, %s18
  %s20 = sld [smem:[#allocation0]]
  $region113: #{tpu_custom_call.1} parent=0
    _
  %s22 = ssub.s32 1, %s20
  %s23 = scalar_select 0, %s22, %s20
  $region1: #{tpu_custom_call.1} parent=0
    #allocation2 [shape = 'u8[8192]{0}', space=vmem, size = 0x2000, scoped, tag = 'output window, operand 0']
    #allocation3 [shape = 's32[2]{0}', space=sflag, size = 0x8, scoped, tag = 'scoped memory for tpu_custom_call.1']
    #allocation4 [shape = 'u8[24576]{0}', space=vmem, size = 0x6000, scoped, tag = 'output window, operand 2']
    #allocation5 [shape = 's32[2]{0}', space=sflag, size = 0x8, scoped, tag = 'scoped memory for tpu_custom_call.1']
    %24 = vsyncpa [#allocation3], 0
    %s25 = scalar_lea.sflag [#allocation3], 1
    %26 = vsyncpa %s25, 0
    %27 = vsyncpa [#allocation5], 0
    %s28 = scalar_lea.sflag [#allocation5], 1
    %29 = vsyncpa %s28, 0
    loop: start=0, step=1, limit=4
    $region2: #{tpu_custom_call.1} parent=1 // loop_pre_header
      _
    $region3: #{tpu_custom_call.1} parent=1 // loop_header
      %s31 = sphi 0, %s35
      %p32 = scmp.ge.s32.totalorder %s31, 4
      %s39 = sphi 0, %s39
      %s41 = sphi 0, %s39
      %s42 = sphi 0, %s41
      %s56 = sphi 0, %s42
      %s60 = sphi 0, %s60
      %s62 = sphi 0, %s60
      %s63 = sphi 0, %s62
      %s77 = sphi 0, %s63
      %s81 = sphi 0, %s81
      %s83 = sphi 0, %s81
      %s84 = sphi 0, %s83
      %s98 = sphi 0, %s84
      %s102 = sphi 0, %s102
      %s104 = sphi 0, %s102
      %s105 = sphi 0, %s104
      %s119 = sphi 0, %s105
      %s123 = sphi 0, %s123
      %s125 = sphi 0, %s123
      %s126 = sphi 0, %s125
      %s140 = sphi 0, %s126
      %s146 = sphi 0, %s148
      %s149 = sphi 0, %s146
      %s150 = sphi 0, %s149
      %s166 = sphi 0, %s150
      %s172 = sphi 0, %s174
      %s175 = sphi 0, %s172
      %s176 = sphi 0, %s175
      %s192 = sphi 0, %s176
      %s198 = sphi 0, %s200
      %s201 = sphi 0, %s198
      %s202 = sphi 0, %s201
      %s218 = sphi 0, %s202
      %s224 = sphi 0, %s226
      %s227 = sphi 0, %s224
      %s228 = sphi 0, %s227
      %s244 = sphi 0, %s228
      %s250 = sphi 0, %s252
      %s253 = sphi 0, %s250
      %s254 = sphi 0, %s253
      %s270 = sphi 0, %s254
      %s276 = sphi 0, %s278
      %s279 = sphi 0, %s276
      %s280 = sphi 0, %s279
      %s296 = sphi 0, %s280
      %s302 = sphi 0, %s304
      %s305 = sphi 0, %s302
      %s306 = sphi 0, %s305
      %s322 = sphi 0, %s306
      %s328 = sphi 0, %s330
      %s331 = sphi 0, %s328
      %s332 = sphi 0, %s331
      %s348 = sphi 0, %s332
      %s354 = sphi 0, %s356
      %s357 = sphi 0, %s354
      %s358 = sphi 0, %s357
      %s374 = sphi 0, %s358
      %s380 = sphi 0, %s382
      %s383 = sphi 0, %s380
      %s384 = sphi 0, %s383
      %s400 = sphi 0, %s384
      %s406 = sphi 0, %s408
      %s409 = sphi 0, %s406
      %s410 = sphi 0, %s409
      %s426 = sphi 0, %s410
      %s432 = sphi 0, %s434
      %s435 = sphi 0, %s432
      %s436 = sphi 0, %s435
      %s452 = sphi 0, %s436
      %s458 = sphi 0, %s460
      %s461 = sphi 0, %s458
      %s462 = sphi 0, %s461
      %s478 = sphi 0, %s462
      %s484 = sphi 0, %s486
      %s487 = sphi 0, %s484
      %s488 = sphi 0, %s487
      %s504 = sphi 0, %s488
    $region4: #{tpu_custom_call.1} parent=1 // loop_header_branch
      %34 = sbr.rel (%p32) target = $region8
    $region5: #{tpu_custom_call.1} parent=1 // loop_body
      %s36 = ssub.s32 %s31, 1
      %s37 = ssub.s32 %s31, 2
      %s38 = sadd.s32 %s31, 1
      %s40 = sadd.s32 %s39, 1
      %p43 = scmp.eq.s32.totalorder %s31, 1
      %p44 = scmp.ne.s32.totalorder %s39, %s41
      %p45 = scmp.eq.s32.totalorder %s31, 0
      %p46 = por %p44, %p45
      %p47 = scmp.ne.s32.totalorder %s39, %s41
      %p48 = scmp.eq.s32.totalorder %s36, 1
      %p49 = por %p47, %p48
      %p50 = scmp.ne.s32.totalorder %s41, %s42
      %p51 = scmp.eq.s32.totalorder %s36, 0
      %p52 = por %p50, %p51
      %p53 = scmp.ne.s32.totalorder %s41, %s42
      %p54 = scmp.eq.s32.totalorder %s37, 1
      %p55 = por %p53, %p54
      %p57 = scmp.ne.s32.totalorder %s42, %s56
      %p58 = scmp.eq.s32.totalorder %s37, 0
      %p59 = por %p57, %p58
      %s61 = sadd.s32 %s60, 1
      %p64 = scmp.eq.s32.totalorder %s31, 1
      %p65 = scmp.ne.s32.totalorder %s60, %s62
      %p66 = scmp.eq.s32.totalorder %s31, 0
      %p67 = por %p65, %p66
      %p68 = scmp.ne.s32.totalorder %s60, %s62
      %p69 = scmp.eq.s32.totalorder %s36, 1
      %p70 = por %p68, %p69
      %p71 = scmp.ne.s32.totalorder %s62, %s63
      %p72 = scmp.eq.s32.totalorder %s36, 0
      %p73 = por %p71, %p72
      %p74 = scmp.ne.s32.totalorder %s62, %s63
      %p75 = scmp.eq.s32.totalorder %s37, 1
      %p76 = por %p74, %p75
      %p78 = scmp.ne.s32.totalorder %s63, %s77
      %p79 = scmp.eq.s32.totalorder %s37, 0
      %p80 = por %p78, %p79
      %s82 = sadd.s32 %s81, 1
      %p85 = scmp.eq.s32.totalorder %s31, 1
      %p86 = scmp.ne.s32.totalorder %s81, %s83
      %p87 = scmp.eq.s32.totalorder %s31, 0
      %p88 = por %p86, %p87
      %p89 = scmp.ne.s32.totalorder %s81, %s83
      %p90 = scmp.eq.s32.totalorder %s36, 1
      %p91 = por %p89, %p90
      %p92 = scmp.ne.s32.totalorder %s83, %s84
      %p93 = scmp.eq.s32.totalorder %s36, 0
      %p94 = por %p92, %p93
      %p95 = scmp.ne.s32.totalorder %s83, %s84
      %p96 = scmp.eq.s32.totalorder %s37, 1
      %p97 = por %p95, %p96
      %p99 = scmp.ne.s32.totalorder %s84, %s98
      %p100 = scmp.eq.s32.totalorder %s37, 0
      %p101 = por %p99, %p100
      %s103 = sadd.s32 %s102, 1
      %p106 = scmp.eq.s32.totalorder %s31, 1
      %p107 = scmp.ne.s32.totalorder %s102, %s104
      %p108 = scmp.eq.s32.totalorder %s31, 0
      %p109 = por %p107, %p108
      %p110 = scmp.ne.s32.totalorder %s102, %s104
      %p111 = scmp.eq.s32.totalorder %s36, 1
      %p112 = por %p110, %p111
      %p113 = scmp.ne.s32.totalorder %s104, %s105
      %p114 = scmp.eq.s32.totalorder %s36, 0
      %p115 = por %p113, %p114
      %p116 = scmp.ne.s32.totalorder %s104, %s105
      %p117 = scmp.eq.s32.totalorder %s37, 1
      %p118 = por %p116, %p117
      %p120 = scmp.ne.s32.totalorder %s105, %s119
      %p121 = scmp.eq.s32.totalorder %s37, 0
      %p122 = por %p120, %p121
      %s124 = sadd.s32 %s123, 1
      %p127 = scmp.eq.s32.totalorder %s31, 1
      %p128 = scmp.ne.s32.totalorder %s123, %s125
      %p129 = scmp.eq.s32.totalorder %s31, 0
      %p130 = por %p128, %p129
      %p131 = scmp.ne.s32.totalorder %s123, %s125
      %p132 = scmp.eq.s32.totalorder %s36, 1
      %p133 = por %p131, %p132
      %p134 = scmp.ne.s32.totalorder %s125, %s126
      %p135 = scmp.eq.s32.totalorder %s36, 0
      %p136 = por %p134, %p135
      %p137 = scmp.ne.s32.totalorder %s125, %s126
      %p138 = scmp.eq.s32.totalorder %s37, 1
      %p139 = por %p137, %p138
      %p141 = scmp.ne.s32.totalorder %s126, %s140
      %p142 = scmp.eq.s32.totalorder %s37, 0
      %p143 = por %p141, %p142
      %s144 = ssub.s32 %s31, %s38
      %p145 = scmp.eq.s32.totalorder %s144, 0
      %s147 = sadd.s32 %s146, 1
      %s148 = scalar_select %p145, %s146, %s147
      %p151 = pneg %p145
      %p152 = scmp.eq.s32.totalorder %s31, 1
      %p153 = por %p151, %p152
      %p154 = scmp.ne.s32.totalorder %s146, %s149
      %p155 = scmp.eq.s32.totalorder %s31, 0
      %p156 = por %p154, %p155
      %p157 = scmp.ne.s32.totalorder %s146, %s149
      %p158 = scmp.eq.s32.totalorder %s36, 1
      %p159 = por %p157, %p158
      %p160 = scmp.ne.s32.totalorder %s149, %s150
      %p161 = scmp.eq.s32.totalorder %s36, 0
      %p162 = por %p160, %p161
      %p163 = scmp.ne.s32.totalorder %s149, %s150
      %p164 = scmp.eq.s32.totalorder %s37, 1
      %p165 = por %p163, %p164
      %p167 = scmp.ne.s32.totalorder %s150, %s166
      %p168 = scmp.eq.s32.totalorder %s37, 0
      %p169 = por %p167, %p168
      %s170 = ssub.s32 %s31, %s38
      %p171 = scmp.eq.s32.totalorder %s170, 0
      %s173 = sadd.s32 %s172, 1
      %s174 = scalar_select %p171, %s172, %s173
      %p177 = pneg %p171
      %p178 = scmp.eq.s32.totalorder %s31, 1
      %p179 = por %p177, %p178
      %p180 = scmp.ne.s32.totalorder %s172, %s175
      %p181 = scmp.eq.s32.totalorder %s31, 0
      %p182 = por %p180, %p181
      %p183 = scmp.ne.s32.totalorder %s172, %s175
      %p184 = scmp.eq.s32.totalorder %s36, 1
      %p185 = por %p183, %p184
      %p186 = scmp.ne.s32.totalorder %s175, %s176
      %p187 = scmp.eq.s32.totalorder %s36, 0
      %p188 = por %p186, %p187
      %p189 = scmp.ne.s32.totalorder %s175, %s176
      %p190 = scmp.eq.s32.totalorder %s37, 1
      %p191 = por %p189, %p190
      %p193 = scmp.ne.s32.totalorder %s176, %s192
      %p194 = scmp.eq.s32.totalorder %s37, 0
      %p195 = por %p193, %p194
      %s196 = ssub.s32 %s31, %s38
      %p197 = scmp.eq.s32.totalorder %s196, 0
      %s199 = sadd.s32 %s198, 1
      %s200 = scalar_select %p197, %s198, %s199
      %p203 = pneg %p197
      %p204 = scmp.eq.s32.totalorder %s31, 1
      %p205 = por %p203, %p204
      %p206 = scmp.ne.s32.totalorder %s198, %s201
      %p207 = scmp.eq.s32.totalorder %s31, 0
      %p208 = por %p206, %p207
      %p209 = scmp.ne.s32.totalorder %s198, %s201
      %p210 = scmp.eq.s32.totalorder %s36, 1
      %p211 = por %p209, %p210
      %p212 = scmp.ne.s32.totalorder %s201, %s202
      %p213 = scmp.eq.s32.totalorder %s36, 0
      %p214 = por %p212, %p213
      %p215 = scmp.ne.s32.totalorder %s201, %s202
      %p216 = scmp.eq.s32.totalorder %s37, 1
      %p217 = por %p215, %p216
      %p219 = scmp.ne.s32.totalorder %s202, %s218
      %p220 = scmp.eq.s32.totalorder %s37, 0
      %p221 = por %p219, %p220
      %s222 = ssub.s32 %s31, %s38
      %p223 = scmp.eq.s32.totalorder %s222, 0
      %s225 = sadd.s32 %s224, 1
      %s226 = scalar_select %p223, %s224, %s225
      %p229 = pneg %p223
      %p230 = scmp.eq.s32.totalorder %s31, 1
      %p231 = por %p229, %p230
      %p232 = scmp.ne.s32.totalorder %s224, %s227
      %p233 = scmp.eq.s32.totalorder %s31, 0
      %p234 = por %p232, %p233
      %p235 = scmp.ne.s32.totalorder %s224, %s227
      %p236 = scmp.eq.s32.totalorder %s36, 1
      %p237 = por %p235, %p236
      %p238 = scmp.ne.s32.totalorder %s227, %s228
      %p239 = scmp.eq.s32.totalorder %s36, 0
      %p240 = por %p238, %p239
      %p241 = scmp.ne.s32.totalorder %s227, %s228
      %p242 = scmp.eq.s32.totalorder %s37, 1
      %p243 = por %p241, %p242
      %p245 = scmp.ne.s32.totalorder %s228, %s244
      %p246 = scmp.eq.s32.totalorder %s37, 0
      %p247 = por %p245, %p246
      %s248 = ssub.s32 %s31, %s38
      %p249 = scmp.eq.s32.totalorder %s248, 0
      %s251 = sadd.s32 %s250, 1
      %s252 = scalar_select %p249, %s250, %s251
      %p255 = pneg %p249
      %p256 = scmp.eq.s32.totalorder %s31, 1
      %p257 = por %p255, %p256
      %p258 = scmp.ne.s32.totalorder %s250, %s253
      %p259 = scmp.eq.s32.totalorder %s31, 0
      %p260 = por %p258, %p259
      %p261 = scmp.ne.s32.totalorder %s250, %s253
      %p262 = scmp.eq.s32.totalorder %s36, 1
      %p263 = por %p261, %p262
      %p264 = scmp.ne.s32.totalorder %s253, %s254
      %p265 = scmp.eq.s32.totalorder %s36, 0
      %p266 = por %p264, %p265
      %p267 = scmp.ne.s32.totalorder %s253, %s254
      %p268 = scmp.eq.s32.totalorder %s37, 1
      %p269 = por %p267, %p268
      %p271 = scmp.ne.s32.totalorder %s254, %s270
      %p272 = scmp.eq.s32.totalorder %s37, 0
      %p273 = por %p271, %p272
      %s274 = ssub.s32 %s31, %s38
      %p275 = scmp.eq.s32.totalorder %s274, 0
      %s277 = sadd.s32 %s276, 1
      %s278 = scalar_select %p275, %s276, %s277
      %p281 = pneg %p275
      %p282 = scmp.eq.s32.totalorder %s31, 1
      %p283 = por %p281, %p282
      %p284 = scmp.ne.s32.totalorder %s276, %s279
      %p285 = scmp.eq.s32.totalorder %s31, 0
      %p286 = por %p284, %p285
      %p287 = scmp.ne.s32.totalorder %s276, %s279
      %p288 = scmp.eq.s32.totalorder %s36, 1
      %p289 = por %p287, %p288
      %p290 = scmp.ne.s32.totalorder %s279, %s280
      %p291 = scmp.eq.s32.totalorder %s36, 0
      %p292 = por %p290, %p291
      %p293 = scmp.ne.s32.totalorder %s279, %s280
      %p294 = scmp.eq.s32.totalorder %s37, 1
      %p295 = por %p293, %p294
      %p297 = scmp.ne.s32.totalorder %s280, %s296
      %p298 = scmp.eq.s32.totalorder %s37, 0
      %p299 = por %p297, %p298
      %s300 = ssub.s32 %s31, %s38
      %p301 = scmp.eq.s32.totalorder %s300, 0
      %s303 = sadd.s32 %s302, 1
      %s304 = scalar_select %p301, %s302, %s303
      %p307 = pneg %p301
      %p308 = scmp.eq.s32.totalorder %s31, 1
      %p309 = por %p307, %p308
      %p310 = scmp.ne.s32.totalorder %s302, %s305
      %p311 = scmp.eq.s32.totalorder %s31, 0
      %p312 = por %p310, %p311
      %p313 = scmp.ne.s32.totalorder %s302, %s305
      %p314 = scmp.eq.s32.totalorder %s36, 1
      %p315 = por %p313, %p314
      %p316 = scmp.ne.s32.totalorder %s305, %s306
      %p317 = scmp.eq.s32.totalorder %s36, 0
      %p318 = por %p316, %p317
      %p319 = scmp.ne.s32.totalorder %s305, %s306
      %p320 = scmp.eq.s32.totalorder %s37, 1
      %p321 = por %p319, %p320
      %p323 = scmp.ne.s32.totalorder %s306, %s322
      %p324 = scmp.eq.s32.totalorder %s37, 0
      %p325 = por %p323, %p324
      %s326 = ssub.s32 %s31, %s38
      %p327 = scmp.eq.s32.totalorder %s326, 0
      %s329 = sadd.s32 %s328, 1
      %s330 = scalar_select %p327, %s328, %s329
      %p333 = pneg %p327
      %p334 = scmp.eq.s32.totalorder %s31, 1
      %p335 = por %p333, %p334
      %p336 = scmp.ne.s32.totalorder %s328, %s331
      %p337 = scmp.eq.s32.totalorder %s31, 0
      %p338 = por %p336, %p337
      %p339 = scmp.ne.s32.totalorder %s328, %s331
      %p340 = scmp.eq.s32.totalorder %s36, 1
      %p341 = por %p339, %p340
      %p342 = scmp.ne.s32.totalorder %s331, %s332
      %p343 = scmp.eq.s32.totalorder %s36, 0
      %p344 = por %p342, %p343
      %p345 = scmp.ne.s32.totalorder %s331, %s332
      %p346 = scmp.eq.s32.totalorder %s37, 1
      %p347 = por %p345, %p346
      %p349 = scmp.ne.s32.totalorder %s332, %s348
      %p350 = scmp.eq.s32.totalorder %s37, 0
      %p351 = por %p349, %p350
      %s352 = ssub.s32 %s31, %s38
      %p353 = scmp.eq.s32.totalorder %s352, 0
      %s355 = sadd.s32 %s354, 1
      %s356 = scalar_select %p353, %s354, %s355
      %p359 = pneg %p353
      %p360 = scmp.eq.s32.totalorder %s31, 1
      %p361 = por %p359, %p360
      %p362 = scmp.ne.s32.totalorder %s354, %s357
      %p363 = scmp.eq.s32.totalorder %s31, 0
      %p364 = por %p362, %p363
      %p365 = scmp.ne.s32.totalorder %s354, %s357
      %p366 = scmp.eq.s32.totalorder %s36, 1
      %p367 = por %p365, %p366
      %p368 = scmp.ne.s32.totalorder %s357, %s358
      %p369 = scmp.eq.s32.totalorder %s36, 0
      %p370 = por %p368, %p369
      %p371 = scmp.ne.s32.totalorder %s357, %s358
      %p372 = scmp.eq.s32.totalorder %s37, 1
      %p373 = por %p371, %p372
      %p375 = scmp.ne.s32.totalorder %s358, %s374
      %p376 = scmp.eq.s32.totalorder %s37, 0
      %p377 = por %p375, %p376
      %s378 = ssub.s32 %s31, %s38
      %p379 = scmp.eq.s32.totalorder %s378, 0
      %s381 = sadd.s32 %s380, 1
      %s382 = scalar_select %p379, %s380, %s381
      %p385 = pneg %p379
      %p386 = scmp.eq.s32.totalorder %s31, 1
      %p387 = por %p385, %p386
      %p388 = scmp.ne.s32.totalorder %s380, %s383
      %p389 = scmp.eq.s32.totalorder %s31, 0
      %p390 = por %p388, %p389
      %p391 = scmp.ne.s32.totalorder %s380, %s383
      %p392 = scmp.eq.s32.totalorder %s36, 1
      %p393 = por %p391, %p392
      %p394 = scmp.ne.s32.totalorder %s383, %s384
      %p395 = scmp.eq.s32.totalorder %s36, 0
      %p396 = por %p394, %p395
      %p397 = scmp.ne.s32.totalorder %s383, %s384
      %p398 = scmp.eq.s32.totalorder %s37, 1
      %p399 = por %p397, %p398
      %p401 = scmp.ne.s32.totalorder %s384, %s400
      %p402 = scmp.eq.s32.totalorder %s37, 0
      %p403 = por %p401, %p402
      %s404 = ssub.s32 %s31, %s38
      %p405 = scmp.eq.s32.totalorder %s404, 0
      %s407 = sadd.s32 %s406, 1
      %s408 = scalar_select %p405, %s406, %s407
      %p411 = pneg %p405
      %p412 = scmp.eq.s32.totalorder %s31, 1
      %p413 = por %p411, %p412
      %p414 = scmp.ne.s32.totalorder %s406, %s409
      %p415 = scmp.eq.s32.totalorder %s31, 0
      %p416 = por %p414, %p415
      %p417 = scmp.ne.s32.totalorder %s406, %s409
      %p418 = scmp.eq.s32.totalorder %s36, 1
      %p419 = por %p417, %p418
      %p420 = scmp.ne.s32.totalorder %s409, %s410
      %p421 = scmp.eq.s32.totalorder %s36, 0
      %p422 = por %p420, %p421
      %p423 = scmp.ne.s32.totalorder %s409, %s410
      %p424 = scmp.eq.s32.totalorder %s37, 1
      %p425 = por %p423, %p424
      %p427 = scmp.ne.s32.totalorder %s410, %s426
      %p428 = scmp.eq.s32.totalorder %s37, 0
      %p429 = por %p427, %p428
      %s430 = ssub.s32 %s31, %s38
      %p431 = scmp.eq.s32.totalorder %s430, 0
      %s433 = sadd.s32 %s432, 1
      %s434 = scalar_select %p431, %s432, %s433
      %p437 = pneg %p431
      %p438 = scmp.eq.s32.totalorder %s31, 1
      %p439 = por %p437, %p438
      %p440 = scmp.ne.s32.totalorder %s432, %s435
      %p441 = scmp.eq.s32.totalorder %s31, 0
      %p442 = por %p440, %p441
      %p443 = scmp.ne.s32.totalorder %s432, %s435
      %p444 = scmp.eq.s32.totalorder %s36, 1
      %p445 = por %p443, %p444
      %p446 = scmp.ne.s32.totalorder %s435, %s436
      %p447 = scmp.eq.s32.totalorder %s36, 0
      %p448 = por %p446, %p447
      %p449 = scmp.ne.s32.totalorder %s435, %s436
      %p450 = scmp.eq.s32.totalorder %s37, 1
      %p451 = por %p449, %p450
      %p453 = scmp.ne.s32.totalorder %s436, %s452
      %p454 = scmp.eq.s32.totalorder %s37, 0
      %p455 = por %p453, %p454
      %s456 = ssub.s32 %s31, %s38
      %p457 = scmp.eq.s32.totalorder %s456, 0
      %s459 = sadd.s32 %s458, 1
      %s460 = scalar_select %p457, %s458, %s459
      %p463 = pneg %p457
      %p464 = scmp.eq.s32.totalorder %s31, 1
      %p465 = por %p463, %p464
      %p466 = scmp.ne.s32.totalorder %s458, %s461
      %p467 = scmp.eq.s32.totalorder %s31, 0
      %p468 = por %p466, %p467
      %p469 = scmp.ne.s32.totalorder %s458, %s461
      %p470 = scmp.eq.s32.totalorder %s36, 1
      %p471 = por %p469, %p470
      %p472 = scmp.ne.s32.totalorder %s461, %s462
      %p473 = scmp.eq.s32.totalorder %s36, 0
      %p474 = por %p472, %p473
      %p475 = scmp.ne.s32.totalorder %s461, %s462
      %p476 = scmp.eq.s32.totalorder %s37, 1
      %p477 = por %p475, %p476
      %p479 = scmp.ne.s32.totalorder %s462, %s478
      %p480 = scmp.eq.s32.totalorder %s37, 0
      %p481 = por %p479, %p480
      %s482 = ssub.s32 %s31, %s38
      %p483 = scmp.eq.s32.totalorder %s482, 0
      %s485 = sadd.s32 %s484, 1
      %s486 = scalar_select %p483, %s484, %s485
      %p489 = pneg %p483
      %p490 = scmp.eq.s32.totalorder %s31, 1
      %p491 = por %p489, %p490
      %p492 = scmp.ne.s32.totalorder %s484, %s487
      %p493 = scmp.eq.s32.totalorder %s31, 0
      %p494 = por %p492, %p493
      %p495 = scmp.ne.s32.totalorder %s484, %s487
      %p496 = scmp.eq.s32.totalorder %s36, 1
      %p497 = por %p495, %p496
      %p498 = scmp.ne.s32.totalorder %s487, %s488
      %p499 = scmp.eq.s32.totalorder %s36, 0
      %p500 = por %p498, %p499
      %p501 = scmp.ne.s32.totalorder %s487, %s488
      %p502 = scmp.eq.s32.totalorder %s37, 1
      %p503 = por %p501, %p502
      %p505 = scmp.ne.s32.totalorder %s488, %s504
      %p506 = scmp.eq.s32.totalorder %s37, 0
      %p507 = por %p505, %p506
      %p508 = scmp.le.s32.totalorder 1, %s31
      %p509 = scmp.lt.s32.totalorder %s31, 3
      %p510 = pnand %p508, %p509
      %p511 = pneg %p510
      // Predicated region
      $region9: #{tpu_custom_call.1} parent=5 // pred_check
        _
      $region10: #{tpu_custom_call.1} parent=5 // pred_check_branch
        %513 = sbr.rel (%p510) target = $region12
      $region11: #{tpu_custom_call.1} parent=5 // pred_region
        %s514 = ssub.s32 %s31, 1
        // Predicated region
        $region13: #{tpu_custom_call.1} parent=11 // pred_check
          %p515 = pneg %p52
        $region14: #{tpu_custom_call.1} parent=11 // pred_check_branch
          %517 = sbr.rel (%p515) target = $region16
        $region15: #{tpu_custom_call.1} parent=11 // pred_region
          _
        $region16: #{tpu_custom_call.1} parent=11 // pred_fallthru
          _
        // Predicated region
        $region17: #{tpu_custom_call.1} parent=11 // pred_check
          %p518 = pneg %p73
        $region18: #{tpu_custom_call.1} parent=11 // pred_check_branch
          %520 = sbr.rel (%p518) target = $region20
        $region19: #{tpu_custom_call.1} parent=11 // pred_region
          _
        $region20: #{tpu_custom_call.1} parent=11 // pred_fallthru
          _
        // Predicated region
        $region21: #{tpu_custom_call.1} parent=11 // pred_check
          %p521 = pneg %p94
        $region22: #{tpu_custom_call.1} parent=11 // pred_check_branch
          %523 = sbr.rel (%p521) target = $region24
        $region23: #{tpu_custom_call.1} parent=11 // pred_region
          _
        $region24: #{tpu_custom_call.1} parent=11 // pred_fallthru
          _
        // Predicated region
        $region25: #{tpu_custom_call.1} parent=11 // pred_check
          %p524 = pneg %p115
        $region26: #{tpu_custom_call.1} parent=11 // pred_check_branch
          %526 = sbr.rel (%p524) target = $region28
        $region27: #{tpu_custom_call.1} parent=11 // pred_region
          _
        $region28: #{tpu_custom_call.1} parent=11 // pred_fallthru
          _
        // Predicated region
        $region29: #{tpu_custom_call.1} parent=11 // pred_check
          %p527 = pneg %p136
        $region30: #{tpu_custom_call.1} parent=11 // pred_check_branch
          %529 = sbr.rel (%p527) target = $region32
        $region31: #{tpu_custom_call.1} parent=11 // pred_region
          _
        $region32: #{tpu_custom_call.1} parent=11 // pred_fallthru
          _
      $region12: #{tpu_custom_call.1} parent=5 // pred_fallthru
        _
      %p530 = scmp.lt.s32.totalorder %s31, 2
      // Predicated region
      $region33: #{tpu_custom_call.1} parent=5 // pred_check
        %p531 = pneg %p530
      $region34: #{tpu_custom_call.1} parent=5 // pred_check_branch
        %533 = sbr.rel (%p531) target = $region36
      $region35: #{tpu_custom_call.1} parent=5 // pred_region
        // Predicated region
        $region37: #{tpu_custom_call.1} parent=35 // pred_check
          %p534 = pneg %p156
        $region38: #{tpu_custom_call.1} parent=35 // pred_check_branch
          %536 = sbr.rel (%p534) target = $region40
        $region39: #{tpu_custom_call.1} parent=35 // pred_region
          %p537 = scmp.lt.s32.totalorder %s31, 1
          %s538 = scalar_select %p537, %s31, 1
          %s539 = smul.addr %s538, 2
          %s540 = smul.addr %s539, 8
          %s541 = scalar_lea.vmem %s5, %s540
        $region40: #{tpu_custom_call.1} parent=35 // pred_fallthru
          _
        // Predicated region
        $region41: #{tpu_custom_call.1} parent=35 // pred_check
          %p542 = pneg %p182
        $region42: #{tpu_custom_call.1} parent=35 // pred_check_branch
          %544 = sbr.rel (%p542) target = $region44
        $region43: #{tpu_custom_call.1} parent=35 // pred_region
          %p545 = scmp.lt.s32.totalorder %s31, 1
          %s546 = scalar_select %p545, %s31, 1
          %s547 = smul.addr %s546, 2
          %s548 = smul.addr %s547, 8
          %s549 = scalar_lea.vmem %s6, %s548
        $region44: #{tpu_custom_call.1} parent=35 // pred_fallthru
          _
        // Predicated region
        $region45: #{tpu_custom_call.1} parent=35 // pred_check
          %p550 = pneg %p208
        $region46: #{tpu_custom_call.1} parent=35 // pred_check_branch
          %552 = sbr.rel (%p550) target = $region48
        $region47: #{tpu_custom_call.1} parent=35 // pred_region
          %p553 = scmp.lt.s32.totalorder %s31, 1
          %s554 = scalar_select %p553, %s31, 1
          %s555 = scalar_lea.vmem %s7, %s554
        $region48: #{tpu_custom_call.1} parent=35 // pred_fallthru
          _
        // Predicated region
        $region49: #{tpu_custom_call.1} parent=35 // pred_check
          %p556 = pneg %p234
        $region50: #{tpu_custom_call.1} parent=35 // pred_check_branch
          %558 = sbr.rel (%p556) target = $region52
        $region51: #{tpu_custom_call.1} parent=35 // pred_region
          %p559 = scmp.lt.s32.totalorder %s31, 1
          %s560 = scalar_select %p559, %s31, 1
          %s561 = smul.addr %s560, 10
          %s562 = smul.addr %s561, 8
          %s563 = scalar_lea.vmem %s8, %s562
        $region52: #{tpu_custom_call.1} parent=35 // pred_fallthru
          _
        // Predicated region
        $region53: #{tpu_custom_call.1} parent=35 // pred_check
          %p564 = pneg %p260
        $region54: #{tpu_custom_call.1} parent=35 // pred_check_branch
          %566 = sbr.rel (%p564) target = $region56
        $region55: #{tpu_custom_call.1} parent=35 // pred_region
          %p567 = scmp.lt.s32.totalorder %s31, 1
          %s568 = scalar_select %p567, %s31, 1
          %s569 = scalar_lea.vmem %s9, %s568
        $region56: #{tpu_custom_call.1} parent=35 // pred_fallthru
          _
        // Predicated region
        $region57: #{tpu_custom_call.1} parent=35 // pred_check
          %p570 = pneg %p286
        $region58: #{tpu_custom_call.1} parent=35 // pred_check_branch
          %572 = sbr.rel (%p570) target = $region60
        $region59: #{tpu_custom_call.1} parent=35 // pred_region
          %p573 = scmp.lt.s32.totalorder %s31, 1
          %s574 = scalar_select %p573, %s31, 1
          %s575 = scalar_lea.vmem %s10, %s574
        $region60: #{tpu_custom_call.1} parent=35 // pred_fallthru
          _
        // Predicated region
        $region61: #{tpu_custom_call.1} parent=35 // pred_check
          %p576 = pneg %p312
        $region62: #{tpu_custom_call.1} parent=35 // pred_check_branch
          %578 = sbr.rel (%p576) target = $region64
        $region63: #{tpu_custom_call.1} parent=35 // pred_region
          %p579 = scmp.lt.s32.totalorder %s31, 1
          %s580 = scalar_select %p579, %s31, 1
          %s581 = smul.addr %s580, 10
          %s582 = smul.addr %s581, 8
          %s583 = scalar_lea.vmem %s11, %s582
        $region64: #{tpu_custom_call.1} parent=35 // pred_fallthru
          _
        // Predicated region
        $region65: #{tpu_custom_call.1} parent=35 // pred_check
          %p584 = pneg %p338
        $region66: #{tpu_custom_call.1} parent=35 // pred_check_branch
          %586 = sbr.rel (%p584) target = $region68
        $region67: #{tpu_custom_call.1} parent=35 // pred_region
          %p587 = scmp.lt.s32.totalorder %s31, 1
          %s588 = scalar_select %p587, %s31, 1
          %s589 = scalar_lea.vmem %s12, %s588
        $region68: #{tpu_custom_call.1} parent=35 // pred_fallthru
          _
        // Predicated region
        $region69: #{tpu_custom_call.1} parent=35 // pred_check
          %p590 = pneg %p364
        $region70: #{tpu_custom_call.1} parent=35 // pred_check_branch
          %592 = sbr.rel (%p590) target = $region72
        $region71: #{tpu_custom_call.1} parent=35 // pred_region
          %p593 = scmp.lt.s32.totalorder %s31, 1
          %s594 = scalar_select %p593, %s31, 1
          %s595 = smul.addr %s594, 12
          %s596 = smul.addr %s595, 8
          %s597 = scalar_lea.vmem %s13, %s596
        $region72: #{tpu_custom_call.1} parent=35 // pred_fallthru
          _
        // Predicated region
        $region73: #{tpu_custom_call.1} parent=35 // pred_check
          %p598 = pneg %p390
        $region74: #{tpu_custom_call.1} parent=35 // pred_check_branch
          %600 = sbr.rel (%p598) target = $region76
        $region75: #{tpu_custom_call.1} parent=35 // pred_region
          %p601 = scmp.lt.s32.totalorder %s31, 1
          %s602 = scalar_select %p601, %s31, 1
          %s603 = scalar_lea.vmem %s14, %s602
        $region76: #{tpu_custom_call.1} parent=35 // pred_fallthru
          _
        // Predicated region
        $region77: #{tpu_custom_call.1} parent=35 // pred_check
          %p604 = pneg %p416
        $region78: #{tpu_custom_call.1} parent=35 // pred_check_branch
          %606 = sbr.rel (%p604) target = $region80
        $region79: #{tpu_custom_call.1} parent=35 // pred_region
          %p607 = scmp.lt.s32.totalorder %s31, 1
          %s608 = scalar_select %p607, %s31, 1
          %s609 = scalar_lea.vmem %s15, %s608
        $region80: #{tpu_custom_call.1} parent=35 // pred_fallthru
          _
      $region36: #{tpu_custom_call.1} parent=5 // pred_fallthru
        _
      %p610 = scmp.le.s32.totalorder 1, %s31
      %p611 = scmp.lt.s32.totalorder %s31, 3
      %p612 = pnand %p610, %p611
      %p613 = pneg %p612
      // Predicated region
      $region81: #{tpu_custom_call.1} parent=5 // pred_check
        _
      $region82: #{tpu_custom_call.1} parent=5 // pred_check_branch
        %615 = sbr.rel (%p612) target = $region84
      $region83: #{tpu_custom_call.1} parent=5 // pred_region
        %s616 = ssub.s32 %s31, 1
        %p617 = pneg %p52
        %p618 = pneg %p49
        %p619 = pneg %p73
        %p620 = pneg %p70
        %p621 = pneg %p94
        %p622 = pneg %p91
        %p623 = pneg %p115
        %p624 = pneg %p112
        %p625 = pneg %p136
        %p626 = pneg %p133
        %p627 = scmp.lt.s32.totalorder %s36, 1
        %s628 = scalar_select %p627, %s36, 1
        %s629 = smul.addr %s628, 2
        %s630 = smul.addr %s629, 8
        %s631 = scalar_lea.vmem %s5, %s630
        %p632 = pneg %p162
        %p633 = pneg %p159
        %p634 = scmp.lt.s32.totalorder %s36, 1
        %s635 = scalar_select %p634, %s36, 1
        %s636 = smul.addr %s635, 2
        %s637 = smul.addr %s636, 8
        %s638 = scalar_lea.vmem %s6, %s637
        %p639 = pneg %p188
        %p640 = pneg %p185
        %p641 = scmp.lt.s32.totalorder %s36, 1
        %s642 = scalar_select %p641, %s36, 1
        %s643 = scalar_lea.vmem %s7, %s642
        %p644 = pneg %p214
        %p645 = pneg %p211
        %p646 = scmp.lt.s32.totalorder %s36, 1
        %s647 = scalar_select %p646, %s36, 1
        %s648 = smul.addr %s647, 10
        %s649 = smul.addr %s648, 8
        %s650 = scalar_lea.vmem %s8, %s649
        %p651 = pneg %p240
        %p652 = pneg %p237
        %p653 = scmp.lt.s32.totalorder %s36, 1
        %s654 = scalar_select %p653, %s36, 1
        %s655 = scalar_lea.vmem %s9, %s654
        %p656 = pneg %p266
        %p657 = pneg %p263
        %p658 = scmp.lt.s32.totalorder %s36, 1
        %s659 = scalar_select %p658, %s36, 1
        %s660 = scalar_lea.vmem %s10, %s659
        %p661 = pneg %p292
        %p662 = pneg %p289
        %p663 = scmp.lt.s32.totalorder %s36, 1
        %s664 = scalar_select %p663, %s36, 1
        %s665 = smul.addr %s664, 10
        %s666 = smul.addr %s665, 8
        %s667 = scalar_lea.vmem %s11, %s666
        %p668 = pneg %p318
        %p669 = pneg %p315
        %p670 = scmp.lt.s32.totalorder %s36, 1
        %s671 = scalar_select %p670, %s36, 1
        %s672 = scalar_lea.vmem %s12, %s671
        %p673 = pneg %p344
        %p674 = pneg %p341
        %p675 = scmp.lt.s32.totalorder %s36, 1
        %s676 = scalar_select %p675, %s36, 1
        %s677 = smul.addr %s676, 12
        %s678 = smul.addr %s677, 8
        %s679 = scalar_lea.vmem %s13, %s678
        %p680 = pneg %p370
        %p681 = pneg %p367
        %p682 = scmp.lt.s32.totalorder %s36, 1
        %s683 = scalar_select %p682, %s36, 1
        %s684 = scalar_lea.vmem %s14, %s683
        %p685 = pneg %p396
        %p686 = pneg %p393
        %p687 = scmp.lt.s32.totalorder %s36, 1
        %s688 = scalar_select %p687, %s36, 1
        %s689 = scalar_lea.vmem %s15, %s688
        %p690 = pneg %p422
        %p691 = pneg %p419
        %p692 = pneg %p448
        %p693 = pneg %p445
        %s694 = sand.u32 %s435, 1
        %s695 = scalar_lea.sflag [#allocation3], %s694
        %s696 = sand.u32 %s435, 1
        %s697 = smul.addr %s696, 8
        %s698 = scalar_lea.vmem [#allocation2], %s697
        %p699 = pneg %p474
        %p700 = pneg %p471
        %p701 = scmp.lt.s32.totalorder %s36, 1
        %s702 = scalar_select %p701, %s36, 1
        %s703 = smul.addr %s702, 3
        %s704 = smul.addr %s703, 8
        %s705 = scalar_lea.vmem %s17, %s704
        %p706 = pneg %p500
        %p707 = pneg %p497
        %s708 = sand.u32 %s487, 1
        %s709 = scalar_lea.sflag [#allocation5], %s708
        %s710 = sand.u32 %s487, 1
        %s711 = smul.addr %s710, 24
        %s712 = scalar_lea.vmem [#allocation4], %s711
        %p713 = scmp.lt.s32.totalorder %s36, 1
        %s714 = scalar_select %p713, %s36, 1
        %s715 = smul.addr %s714, 2
        %s716 = smul.addr %s715, 8
        %s717 = scalar_lea.vmem %s5, %s716
        %p718 = scmp.lt.s32.totalorder %s36, 1
        %s719 = scalar_select %p718, %s36, 1
        %s720 = smul.addr %s719, 2
        %s721 = smul.addr %s720, 8
        %s722 = scalar_lea.vmem %s6, %s721
        %p723 = scmp.lt.s32.totalorder %s36, 1
        %s724 = scalar_select %p723, %s36, 1
        %s725 = scalar_lea.vmem %s7, %s724
        %p726 = scmp.lt.s32.totalorder %s36, 1
        %s727 = scalar_select %p726, %s36, 1
        %s728 = smul.addr %s727, 10
        %s729 = smul.addr %s728, 8
        %s730 = scalar_lea.vmem %s8, %s729
        %p731 = scmp.lt.s32.totalorder %s36, 1
        %s732 = scalar_select %p731, %s36, 1
        %s733 = scalar_lea.vmem %s9, %s732
        %p734 = scmp.lt.s32.totalorder %s36, 1
        %s735 = scalar_select %p734, %s36, 1
        %s736 = scalar_lea.vmem %s10, %s735
        %p737 = scmp.lt.s32.totalorder %s36, 1
        %s738 = scalar_select %p737, %s36, 1
        %s739 = smul.addr %s738, 10
        %s740 = smul.addr %s739, 8
        %s741 = scalar_lea.vmem %s11, %s740
        %p742 = scmp.lt.s32.totalorder %s36, 1
        %s743 = scalar_select %p742, %s36, 1
        %s744 = scalar_lea.vmem %s12, %s743
        %p745 = scmp.lt.s32.totalorder %s36, 1
        %s746 = scalar_select %p745, %s36, 1
        %s747 = smul.addr %s746, 12
        %s748 = smul.addr %s747, 8
        %s749 = scalar_lea.vmem %s13, %s748
        %p750 = scmp.lt.s32.totalorder %s36, 1
        %s751 = scalar_select %p750, %s36, 1
        %s752 = scalar_lea.vmem %s14, %s751
        %p753 = scmp.lt.s32.totalorder %s36, 1
        %s754 = scalar_select %p753, %s36, 1
        %s755 = scalar_lea.vmem %s15, %s754
        %p756 = scmp.lt.s32.totalorder %s36, 1
        %s757 = scalar_select %p756, %s36, 1
        %s758 = smul.addr %s757, 3
        %s759 = smul.addr %s758, 8
        %s760 = scalar_lea.vmem %s17, %s759
        %v761 = vld [vmem:[%s0] sm:$0xff]
        %v762 = vld [vmem:[%s1] sm:$0xff]
        %v763 = vld [vmem:[%s1 + $0x8] sm:$0xff]
        %v764 = vld [vmem:[%s1 + $0x10] sm:$0xff]
        %v765 = vld [vmem:[%s2] sm:$0xff]
        %v766 = vld [vmem:[%s2 + $0x8] sm:$0xff]
        %v767 = vld [vmem:[%s2 + $0x10] sm:$0xff]
        %v768 = vld [vmem:[%s3] sm:$0xff]
        %v769 = vld [vmem:[%s3 + $0x8] sm:$0xff]
        %v770 = vld [vmem:[%s3 + $0x10] sm:$0xff]
        %v771 = vld [vmem:[%s4] sm:$0xff]
        %v772 = vld [vmem:[%s717] sm:$0xff]
        %v773 = vld [vmem:[%s717 + $0x8] sm:$0xff]
        %vm774 = vcmask 130048
        %v776 = vsel %vm774, %v761, 0
        %778 = vmatprep.subr.mxu0 0.0
        %779 = vmatpush1.msra.mxu0 0.0
        %780 = vmatprep.subr.mxu0 0.0
        %781 = vmatpush1.msra.mxu0 0.0
        %782 = vmatprep.subr.mxu0 0.0
        %783 = vmatpush1.msra.mxu0 0.0
        %784 = vmatprep.subr.mxu0 0.0
        %785 = vmatpush1.msra.mxu0 0.0
        %786 = vmatprep.subr.mxu0 0.0
        %787 = vmatpush1.msra.mxu0 0.0
        %788 = vmatprep.subr.mxu0 0.0
        %789 = vmatpush1.msra.mxu0 0.0
        %790 = vmatprep.subr.mxu0 0.0
        %791 = vmatpush1.msra.mxu0 0.0
        %792 = vmatprep.subr.mxu0 0.0
        %793 = vmatpush1.msra.mxu0 0.0
        %794 = vmatprep.subr.mxu0 0.0
        %795 = vmatpush1.msra.mxu0 0.0
        %796 = vmatprep.subr.mxu0 0.0
        %797 = vmatpush1.msra.mxu0 0.0
        %798 = vmatprep.subr.mxu0 0.0
        %799 = vmatpush1.msra.mxu0 0.0
        %800 = vmatprep.subr.mxu0 0.0
        %801 = vmatpush1.msra.mxu0 0.0
        %802 = vmatprep.subr.mxu0 0.0
        %803 = vmatpush1.msra.mxu0 0.0
        %804 = vmatprep.subr.mxu0 0.0
        %805 = vmatpush1.msra.mxu0 0.0
        %806 = vmatprep.subr.mxu0 0.0
        %807 = vmatpush1.msra.mxu0 %v773
        %808 = vmatprep.subr.mxu0 0.0
        %809 = vmatpush1.msra.mxu0 %v772
        %810 = vmatprep.subr.mxu0 0.0
        %811 = vmatpush2.msra.mxu0 0.0
        %812 = vmatprep.subr.mxu0 0.0
        %813 = vmatpush2.msra.mxu0 0.0
        %814 = vmatprep.subr.mxu0 0.0
        %815 = vmatpush2.msra.mxu0 0.0
        %816 = vmatprep.subr.mxu0 0.0
        %817 = vmatpush2.msra.mxu0 0.0
        %818 = vmatprep.subr.mxu0 0.0
        %819 = vmatpush2.msra.mxu0 0.0
        %820 = vmatprep.subr.mxu0 0.0
        %821 = vmatpush2.msra.mxu0 0.0
        %822 = vmatprep.subr.mxu0 0.0
        %823 = vmatpush2.msra.mxu0 0.0
        %824 = vmatprep.subr.mxu0 0.0
        %825 = vmatpush2.msra.mxu0 0.0
        %826 = vmatprep.subr.mxu0 0.0
        %827 = vmatpush2.msra.mxu0 0.0
        %828 = vmatprep.subr.mxu0 0.0
        %829 = vmatpush2.msra.mxu0 0.0
        %830 = vmatprep.subr.mxu0 0.0
        %831 = vmatpush2.msra.mxu0 0.0
        %832 = vmatprep.subr.mxu0 0.0
        %833 = vmatpush2.msra.mxu0 0.0
        %834 = vmatprep.subr.mxu0 0.0
        %835 = vmatpush2.msra.mxu0 0.0
        %836 = vmatprep.subr.mxu0 0.0
        %837 = vmatpush2.msra.mxu0 0.0
        %838 = vmatprep.subr.mxu0 0.0
        %839 = vmatpush2.msra.mxu0 0.0
        %840 = vmatprep.subr.mxu0 0.0
        %841 = vmatpush2.msra.mxu0 0.0
        %842 = vmatprep.mubr.f32.mxu0 0.0
        %843 = vmatmul.mubr.f32.gmra.mxu0 %v776
        %v844 = vpop.f32.mrf.mxu0
        %v845 = vadd.f32 0.0, %v844
        %v846 = vpop.f32.mrf.mxu0
        %847 = vdwg.mxu0
        %v848 = vld [vmem:[%s722] sm:$0xff]
        %v849 = vld [vmem:[%s722 + $0x8] sm:$0xff]
        %v851 = vsel %vm774, %v762, 0
        %v854 = vsel %vm774, %v763, 0
        %v857 = vsel %vm774, %v764, 0
        %859 = vmatprep.subr.mxu0 0.0
        %860 = vmatpush1.msra.mxu0 0.0
        %861 = vmatprep.subr.mxu0 0.0
        %862 = vmatpush1.msra.mxu0 0.0
        %863 = vmatprep.subr.mxu0 0.0
        %864 = vmatpush1.msra.mxu0 0.0
        %865 = vmatprep.subr.mxu0 0.0
        %866 = vmatpush1.msra.mxu0 0.0
        %867 = vmatprep.subr.mxu0 0.0
        %868 = vmatpush1.msra.mxu0 0.0
        %869 = vmatprep.subr.mxu0 0.0
        %870 = vmatpush1.msra.mxu0 0.0
        %871 = vmatprep.subr.mxu0 0.0
        %872 = vmatpush1.msra.mxu0 0.0
        %873 = vmatprep.subr.mxu0 0.0
        %874 = vmatpush1.msra.mxu0 0.0
        %875 = vmatprep.subr.mxu0 0.0
        %876 = vmatpush1.msra.mxu0 0.0
        %877 = vmatprep.subr.mxu0 0.0
        %878 = vmatpush1.msra.mxu0 0.0
        %879 = vmatprep.subr.mxu0 0.0
        %880 = vmatpush1.msra.mxu0 0.0
        %881 = vmatprep.subr.mxu0 0.0
        %882 = vmatpush1.msra.mxu0 0.0
        %883 = vmatprep.subr.mxu0 0.0
        %884 = vmatpush1.msra.mxu0 0.0
        %885 = vmatprep.subr.mxu0 0.0
        %886 = vmatpush1.msra.mxu0 0.0
        %887 = vmatprep.subr.mxu0 0.0
        %888 = vmatpush1.msra.mxu0 %v849
        %889 = vmatprep.subr.mxu0 0.0
        %890 = vmatpush1.msra.mxu0 %v848
        %891 = vmatprep.subr.mxu0 0.0
        %892 = vmatpush2.msra.mxu0 0.0
        %893 = vmatprep.subr.mxu0 0.0
        %894 = vmatpush2.msra.mxu0 0.0
        %895 = vmatprep.subr.mxu0 0.0
        %896 = vmatpush2.msra.mxu0 0.0
        %897 = vmatprep.subr.mxu0 0.0
        %898 = vmatpush2.msra.mxu0 0.0
        %899 = vmatprep.subr.mxu0 0.0
        %900 = vmatpush2.msra.mxu0 0.0
        %901 = vmatprep.subr.mxu0 0.0
        %902 = vmatpush2.msra.mxu0 0.0
        %903 = vmatprep.subr.mxu0 0.0
        %904 = vmatpush2.msra.mxu0 0.0
        %905 = vmatprep.subr.mxu0 0.0
        %906 = vmatpush2.msra.mxu0 0.0
        %907 = vmatprep.subr.mxu0 0.0
        %908 = vmatpush2.msra.mxu0 0.0
        %909 = vmatprep.subr.mxu0 0.0
        %910 = vmatpush2.msra.mxu0 0.0
        %911 = vmatprep.subr.mxu0 0.0
        %912 = vmatpush2.msra.mxu0 0.0
        %913 = vmatprep.subr.mxu0 0.0
        %914 = vmatpush2.msra.mxu0 0.0
        %915 = vmatprep.subr.mxu0 0.0
        %916 = vmatpush2.msra.mxu0 0.0
        %917 = vmatprep.subr.mxu0 0.0
        %918 = vmatpush2.msra.mxu0 0.0
        %919 = vmatprep.subr.mxu0 0.0
        %920 = vmatpush2.msra.mxu0 0.0
        %921 = vmatprep.subr.mxu0 0.0
        %922 = vmatpush2.msra.mxu0 0.0
        %923 = vmatprep.mubr.f32.mxu0 0.0
        %924 = vmatmul.mubr.f32.gmra.mxu0 %v851
        %v925 = vpop.f32.mrf.mxu0
        %v926 = vadd.f32 0.0, %v925
        %v927 = vpop.f32.mrf.mxu0
        %928 = vmatprep.mubr.f32.mxu0 0.0
        %929 = vmatmul.mubr.f32.gmra.mxu0 %v854
        %v930 = vpop.f32.mrf.mxu0
        %v931 = vadd.f32 0.0, %v930
        %v932 = vpop.f32.mrf.mxu0
        %933 = vmatprep.mubr.f32.mxu0 0.0
        %934 = vmatmul.mubr.f32.gmra.mxu0 %v857
        %v935 = vpop.f32.mrf.mxu0
        %v936 = vadd.f32 0.0, %v935
        %v937 = vpop.f32.mrf.mxu0
        %938 = vdwg.mxu0
        %vm939 = vcmp.gt.f32.partialorder %v926, 0.0
        %vm940 = vcmp.gt.f32.partialorder %v931, 0.0
        %vm941 = vcmp.gt.f32.partialorder %v936, 0.0
        %v942 = vmul.f32 %v926, 0.1
        %v943 = vmul.f32 %v931, 0.1
        %v944 = vmul.f32 %v936, 0.1
        %v945 = vsel %vm939, %v926, %v942
        %v946 = vsel %vm940, %v931, %v943
        %v947 = vsel %vm941, %v936, %v944
        %v948 = vld [vmem:[%s725] sm:$0x1]
        %v950 = vlaneseq
        %v951 = vshrl.u32 %v950, 7
        %v952 = vsub.s32 0, %v951
        %v953 = vrot.slane %v948, %v952
        %v955 = vmul.f32 %v945, %v953
        %v956 = vmul.f32 %v946, %v953
        %v957 = vmul.f32 %v947, %v953
        %v958 = vsel %vm774, %v955, 0.0
        %959 = vadd.xlane.f32.xlu0 %v958
        %v960 = vpop.xlane.xlu0 %959
        %v961 = vsel %vm774, %v956, 0.0
        %962 = vadd.xlane.f32.xlu0 %v961
        %v963 = vpop.xlane.xlu0 %962
        %v964 = vsel %vm774, %v957, 0.0
        %965 = vadd.xlane.f32.xlu0 %v964
        %v966 = vpop.xlane.xlu0 %965
        %v967 = vmul.f32 %v960, %v926
        %v968 = vmul.f32 %v963, %v931
        %v969 = vmul.f32 %v966, %v936
        %vm970 = vcmask 64512
        %v972 = vsel %vm970, %v765, 0
        %v975 = vsel %vm970, %v766, 0
        %v978 = vsel %vm970, %v767, 0
        %980 = vmatprep.subr.mxu0 0.0
        %981 = vmatpush1.msra.mxu0 0.0
        %982 = vmatprep.subr.mxu0 0.0
        %983 = vmatpush1.msra.mxu0 0.0
        %984 = vmatprep.subr.mxu0 0.0
        %985 = vmatpush1.msra.mxu0 0.0
        %986 = vmatprep.subr.mxu0 0.0
        %987 = vmatpush1.msra.mxu0 0.0
        %988 = vmatprep.subr.mxu0 0.0
        %989 = vmatpush1.msra.mxu0 0.0
        %990 = vmatprep.subr.mxu0 0.0
        %991 = vmatpush1.msra.mxu0 0.0
        %992 = vmatprep.subr.mxu0 0.0
        %993 = vmatpush1.msra.mxu0 0.0
        %994 = vmatprep.subr.mxu0 0.0
        %995 = vmatpush1.msra.mxu0 0.0
        %996 = vmatprep.subr.mxu0 0.0
        %997 = vmatpush1.msra.mxu0 0.0
        %998 = vmatprep.subr.mxu0 0.0
        %999 = vmatpush1.msra.mxu0 0.0
        %1000 = vmatprep.subr.mxu0 0.0
        %1001 = vmatpush1.msra.mxu0 0.0
        %1002 = vmatprep.subr.mxu0 0.0
        %1003 = vmatpush1.msra.mxu0 0.0
        %1004 = vmatprep.subr.mxu0 0.0
        %1005 = vmatpush1.msra.mxu0 0.0
        %1006 = vmatprep.subr.mxu0 0.0
        %1007 = vmatpush1.msra.mxu0 0.0
        %1008 = vmatprep.subr.mxu0 0.0
        %1009 = vmatpush1.msra.mxu0 0.0
        %1010 = vmatprep.subr.mxu0 0.0
        %1011 = vmatpush1.msra.mxu0 %v845
        %1012 = vmatprep.subr.mxu0 0.0
        %1013 = vmatpush2.msra.mxu0 0.0
        %1014 = vmatprep.subr.mxu0 0.0
        %1015 = vmatpush2.msra.mxu0 0.0
        %1016 = vmatprep.subr.mxu0 0.0
        %1017 = vmatpush2.msra.mxu0 0.0
        %1018 = vmatprep.subr.mxu0 0.0
        %1019 = vmatpush2.msra.mxu0 0.0
        %1020 = vmatprep.subr.mxu0 0.0
        %1021 = vmatpush2.msra.mxu0 0.0
        %1022 = vmatprep.subr.mxu0 0.0
        %1023 = vmatpush2.msra.mxu0 0.0
        %1024 = vmatprep.subr.mxu0 0.0
        %1025 = vmatpush2.msra.mxu0 0.0
        %1026 = vmatprep.subr.mxu0 0.0
        %1027 = vmatpush2.msra.mxu0 0.0
        %1028 = vmatprep.subr.mxu0 0.0
        %1029 = vmatpush2.msra.mxu0 0.0
        %1030 = vmatprep.subr.mxu0 0.0
        %1031 = vmatpush2.msra.mxu0 0.0
        %1032 = vmatprep.subr.mxu0 0.0
        %1033 = vmatpush2.msra.mxu0 0.0
        %1034 = vmatprep.subr.mxu0 0.0
        %1035 = vmatpush2.msra.mxu0 0.0
        %1036 = vmatprep.subr.mxu0 0.0
        %1037 = vmatpush2.msra.mxu0 0.0
        %1038 = vmatprep.subr.mxu0 0.0
        %1039 = vmatpush2.msra.mxu0 0.0
        %1040 = vmatprep.subr.mxu0 0.0
        %1041 = vmatpush2.msra.mxu0 0.0
        %1042 = vmatprep.subr.mxu0 0.0
        %1043 = vmatpush2.msra.mxu0 0.0
        %1044 = vmatprep.mubr.f32.mxu0 0.0
        %1045 = vmatmul.mubr.f32.gmra.mxu0 %v972
        %v1046 = vpop.f32.mrf.mxu0
        %v1047 = vadd.f32 0.0, %v1046
        %v1048 = vpop.f32.mrf.mxu0
        %1049 = vmatprep.mubr.f32.mxu0 0.0
        %1050 = vmatmul.mubr.f32.gmra.mxu0 %v975
        %v1051 = vpop.f32.mrf.mxu0
        %v1052 = vadd.f32 0.0, %v1051
        %v1053 = vpop.f32.mrf.mxu0
        %1054 = vmatprep.mubr.f32.mxu0 0.0
        %1055 = vmatmul.mubr.f32.gmra.mxu0 %v978
        %v1056 = vpop.f32.mrf.mxu0
        %v1057 = vadd.f32 0.0, %v1056
        %v1058 = vpop.f32.mrf.mxu0
        %1059 = vdwg.mxu0
        %v1061 = vsel %vm970, %v768, 0
        %v1064 = vsel %vm970, %v769, 0
        %v1067 = vsel %vm970, %v770, 0
        %1069 = vmatprep.subr.mxu0 0.0
        %1070 = vmatpush1.msra.mxu0 0.0
        %1071 = vmatprep.subr.mxu0 0.0
        %1072 = vmatpush1.msra.mxu0 0.0
        %1073 = vmatprep.subr.mxu0 0.0
        %1074 = vmatpush1.msra.mxu0 0.0
        %1075 = vmatprep.subr.mxu0 0.0
        %1076 = vmatpush1.msra.mxu0 0.0
        %1077 = vmatprep.subr.mxu0 0.0
        %1078 = vmatpush1.msra.mxu0 0.0
        %1079 = vmatprep.subr.mxu0 0.0
        %1080 = vmatpush1.msra.mxu0 0.0
        %1081 = vmatprep.subr.mxu0 0.0
        %1082 = vmatpush1.msra.mxu0 0.0
        %1083 = vmatprep.subr.mxu0 0.0
        %1084 = vmatpush1.msra.mxu0 0.0
        %1085 = vmatprep.subr.mxu0 0.0
        %1086 = vmatpush1.msra.mxu0 0.0
        %1087 = vmatprep.subr.mxu0 0.0
        %1088 = vmatpush1.msra.mxu0 0.0
        %1089 = vmatprep.subr.mxu0 0.0
        %1090 = vmatpush1.msra.mxu0 0.0
        %1091 = vmatprep.subr.mxu0 0.0
        %1092 = vmatpush1.msra.mxu0 0.0
        %1093 = vmatprep.subr.mxu0 0.0
        %1094 = vmatpush1.msra.mxu0 0.0
        %1095 = vmatprep.subr.mxu0 0.0
        %1096 = vmatpush1.msra.mxu0 0.0
        %1097 = vmatprep.subr.mxu0 0.0
        %1098 = vmatpush1.msra.mxu0 0.0
        %1099 = vmatprep.subr.mxu0 0.0
        %1100 = vmatpush1.msra.mxu0 %v845
        %1101 = vmatprep.subr.mxu0 0.0
        %1102 = vmatpush2.msra.mxu0 0.0
        %1103 = vmatprep.subr.mxu0 0.0
        %1104 = vmatpush2.msra.mxu0 0.0
        %1105 = vmatprep.subr.mxu0 0.0
        %1106 = vmatpush2.msra.mxu0 0.0
        %1107 = vmatprep.subr.mxu0 0.0
        %1108 = vmatpush2.msra.mxu0 0.0
        %1109 = vmatprep.subr.mxu0 0.0
        %1110 = vmatpush2.msra.mxu0 0.0
        %1111 = vmatprep.subr.mxu0 0.0
        %1112 = vmatpush2.msra.mxu0 0.0
        %1113 = vmatprep.subr.mxu0 0.0
        %1114 = vmatpush2.msra.mxu0 0.0
        %1115 = vmatprep.subr.mxu0 0.0
        %1116 = vmatpush2.msra.mxu0 0.0
        %1117 = vmatprep.subr.mxu0 0.0
        %1118 = vmatpush2.msra.mxu0 0.0
        %1119 = vmatprep.subr.mxu0 0.0
        %1120 = vmatpush2.msra.mxu0 0.0
        %1121 = vmatprep.subr.mxu0 0.0
        %1122 = vmatpush2.msra.mxu0 0.0
        %1123 = vmatprep.subr.mxu0 0.0
        %1124 = vmatpush2.msra.mxu0 0.0
        %1125 = vmatprep.subr.mxu0 0.0
        %1126 = vmatpush2.msra.mxu0 0.0
        %1127 = vmatprep.subr.mxu0 0.0
        %1128 = vmatpush2.msra.mxu0 0.0
        %1129 = vmatprep.subr.mxu0 0.0
        %1130 = vmatpush2.msra.mxu0 0.0
        %1131 = vmatprep.subr.mxu0 0.0
        %1132 = vmatpush2.msra.mxu0 0.0
        %1133 = vmatprep.mubr.f32.mxu0 0.0
        %1134 = vmatmul.mubr.f32.gmra.mxu0 %v1061
        %v1135 = vpop.f32.mrf.mxu0
        %v1136 = vadd.f32 0.0, %v1135
        %v1137 = vpop.f32.mrf.mxu0
        %1138 = vmatprep.mubr.f32.mxu0 0.0
        %1139 = vmatmul.mubr.f32.gmra.mxu0 %v1064
        %v1140 = vpop.f32.mrf.mxu0
        %v1141 = vadd.f32 0.0, %v1140
        %v1142 = vpop.f32.mrf.mxu0
        %1143 = vmatprep.mubr.f32.mxu0 0.0
        %1144 = vmatmul.mubr.f32.gmra.mxu0 %v1067
        %v1145 = vpop.f32.mrf.mxu0
        %v1146 = vadd.f32 0.0, %v1145
        %v1147 = vpop.f32.mrf.mxu0
        %1148 = vdwg.mxu0
        %1152 = vrot.lane.b32.xlu0 %v1136, 32
        %v1153 = vpop.permute.xlu0 %1152
        %1154 = vrot.lane.b32.xlu0 %v1141, 32
        %v1155 = vpop.permute.xlu0 %1154
        %1156 = vrot.lane.b32.xlu0 %v1146, 32
        %v1157 = vpop.permute.xlu0 %1156
        %1164 = vrot.lane.b32.xlu0 %v967, 64
        %v1165 = vpop.permute.xlu0 %1164
        %1166 = vrot.lane.b32.xlu0 %v968, 64
        %v1167 = vpop.permute.xlu0 %1166
        %1168 = vrot.lane.b32.xlu0 %v969, 64
        %v1169 = vpop.permute.xlu0 %1168
        %vm1173 = vcmask 261120
        %v1174 = vsel %vm1173, %v1047, %v1153
        %v1175 = vsel %vm1173, %v1052, %v1155
        %v1176 = vsel %vm1173, %v1057, %v1157
        %vm1177 = vcmask 523264
        %v1178 = vsel %vm1177, %v1174, %v1165
        %v1179 = vsel %vm1177, %v1175, %v1167
        %v1180 = vsel %vm1177, %v1176, %v1169
        %v1181 = vld [vmem:[%s730] sm:$0xff]
        %v1182 = vld [vmem:[%s730 + $0x8] sm:$0xff]
        %v1183 = vld [vmem:[%s730 + $0x10] sm:$0xff]
        %v1184 = vld [vmem:[%s730 + $0x18] sm:$0xff]
        %v1185 = vld [vmem:[%s730 + $0x20] sm:$0xff]
        %v1186 = vld [vmem:[%s730 + $0x28] sm:$0xff]
        %v1187 = vld [vmem:[%s730 + $0x30] sm:$0xff]
        %v1188 = vld [vmem:[%s730 + $0x38] sm:$0xff]
        %v1189 = vld [vmem:[%s730 + $0x40] sm:$0xff]
        %v1190 = vld [vmem:[%s730 + $0x48] sm:$0xff]
        %v1191 = vld [vmem:[%s733] sm:$0x1]
        %v1193 = vlaneseq
        %v1194 = vshrl.u32 %v1193, 7
        %v1195 = vsub.s32 0, %v1194
        %v1196 = vrot.slane %v1191, %v1195
        %vm1198 = vcmask 654336
        %v1200 = vsel %vm1198, %v1178, 0
        %v1203 = vsel %vm1198, %v1179, 0
        %v1206 = vsel %vm1198, %v1180, 0
        %1208 = vmatprep.subr.mxu0 0.0
        %1209 = vmatpush1.msra.mxu0 0.0
        %1210 = vmatprep.subr.mxu0 0.0
        %1211 = vmatpush1.msra.mxu0 0.0
        %1212 = vmatprep.subr.mxu0 0.0
        %1213 = vmatpush1.msra.mxu0 0.0
        %1214 = vmatprep.subr.mxu0 0.0
        %1215 = vmatpush1.msra.mxu0 0.0
        %1216 = vmatprep.subr.mxu0 0.0
        %1217 = vmatpush1.msra.mxu0 0.0
        %1218 = vmatprep.subr.mxu0 0.0
        %1219 = vmatpush1.msra.mxu0 0.0
        %1220 = vmatprep.subr.mxu0 0.0
        %1221 = vmatpush1.msra.mxu0 %v1190
        %1222 = vmatprep.subr.mxu0 0.0
        %1223 = vmatpush1.msra.mxu0 %v1189
        %1224 = vmatprep.subr.mxu0 0.0
        %1225 = vmatpush1.msra.mxu0 %v1188
        %1226 = vmatprep.subr.mxu0 0.0
        %1227 = vmatpush1.msra.mxu0 %v1187
        %1228 = vmatprep.subr.mxu0 0.0
        %1229 = vmatpush1.msra.mxu0 %v1186
        %1230 = vmatprep.subr.mxu0 0.0
        %1231 = vmatpush1.msra.mxu0 %v1185
        %1232 = vmatprep.subr.mxu0 0.0
        %1233 = vmatpush1.msra.mxu0 %v1184
        %1234 = vmatprep.subr.mxu0 0.0
        %1235 = vmatpush1.msra.mxu0 %v1183
        %1236 = vmatprep.subr.mxu0 0.0
        %1237 = vmatpush1.msra.mxu0 %v1182
        %1238 = vmatprep.subr.mxu0 0.0
        %1239 = vmatpush1.msra.mxu0 %v1181
        %1240 = vmatprep.subr.mxu0 0.0
        %1241 = vmatpush2.msra.mxu0 0.0
        %1242 = vmatprep.subr.mxu0 0.0
        %1243 = vmatpush2.msra.mxu0 0.0
        %1244 = vmatprep.subr.mxu0 0.0
        %1245 = vmatpush2.msra.mxu0 0.0
        %1246 = vmatprep.subr.mxu0 0.0
        %1247 = vmatpush2.msra.mxu0 0.0
        %1248 = vmatprep.subr.mxu0 0.0
        %1249 = vmatpush2.msra.mxu0 0.0
        %1250 = vmatprep.subr.mxu0 0.0
        %1251 = vmatpush2.msra.mxu0 0.0
        %1252 = vmatprep.subr.mxu0 0.0
        %1253 = vmatpush2.msra.mxu0 0.0
        %1254 = vmatprep.subr.mxu0 0.0
        %1255 = vmatpush2.msra.mxu0 0.0
        %1256 = vmatprep.subr.mxu0 0.0
        %1257 = vmatpush2.msra.mxu0 0.0
        %1258 = vmatprep.subr.mxu0 0.0
        %1259 = vmatpush2.msra.mxu0 0.0
        %1260 = vmatprep.subr.mxu0 0.0
        %1261 = vmatpush2.msra.mxu0 0.0
        %1262 = vmatprep.subr.mxu0 0.0
        %1263 = vmatpush2.msra.mxu0 0.0
        %1264 = vmatprep.subr.mxu0 0.0
        %1265 = vmatpush2.msra.mxu0 0.0
        %1266 = vmatprep.subr.mxu0 0.0
        %1267 = vmatpush2.msra.mxu0 0.0
        %1268 = vmatprep.subr.mxu0 0.0
        %1269 = vmatpush2.msra.mxu0 0.0
        %1270 = vmatprep.subr.mxu0 0.0
        %1271 = vmatpush2.msra.mxu0 0.0
        %1272 = vmatprep.mubr.f32.mxu0 0.0
        %1273 = vmatmul.mubr.f32.gmra.mxu0 %v1200
        %v1274 = vpop.f32.mrf.mxu0
        %v1275 = vadd.f32 %v1196, %v1274
        %v1276 = vpop.f32.mrf.mxu0
        %1277 = vmatprep.mubr.f32.mxu0 0.0
        %1278 = vmatmul.mubr.f32.gmra.mxu0 %v1203
        %v1279 = vpop.f32.mrf.mxu0
        %v1280 = vadd.f32 %v1196, %v1279
        %v1281 = vpop.f32.mrf.mxu0
        %1282 = vmatprep.mubr.f32.mxu0 0.0
        %1283 = vmatmul.mubr.f32.gmra.mxu0 %v1206
        %v1284 = vpop.f32.mrf.mxu0
        %v1285 = vadd.f32 %v1196, %v1284
        %v1286 = vpop.f32.mrf.mxu0
        %1287 = vdwg.mxu0
        %vm1288 = vcmp.gt.f32.partialorder %v1275, 0.0
        %vm1289 = vcmp.gt.f32.partialorder %v1280, 0.0
        %vm1290 = vcmp.gt.f32.partialorder %v1285, 0.0
        %v1291 = vmul.f32 %v1275, 0.1
        %v1292 = vmul.f32 %v1280, 0.1
        %v1293 = vmul.f32 %v1285, 0.1
        %v1294 = vsel %vm1288, %v1275, %v1291
        %v1295 = vsel %vm1289, %v1280, %v1292
        %v1296 = vsel %vm1290, %v1285, %v1293
        %v1297 = vld [vmem:[%s736] sm:$0x1]
        %v1299 = vlaneseq
        %v1300 = vshrl.u32 %v1299, 7
        %v1301 = vsub.s32 0, %v1300
        %v1302 = vrot.slane %v1297, %v1301
        %v1304 = vmul.f32 %v1294, %v1302
        %v1305 = vmul.f32 %v1295, %v1302
        %v1306 = vmul.f32 %v1296, %v1302
        %v1307 = vsel %vm1173, %v1304, 0.0
        %1308 = vadd.xlane.f32.xlu0 %v1307
        %v1309 = vpop.xlane.xlu0 %1308
        %v1310 = vsel %vm1173, %v1305, 0.0
        %1311 = vadd.xlane.f32.xlu0 %v1310
        %v1312 = vpop.xlane.xlu0 %1311
        %v1313 = vsel %vm1173, %v1306, 0.0
        %1314 = vadd.xlane.f32.xlu0 %v1313
        %v1315 = vpop.xlane.xlu0 %1314
        %v1316 = vmul.f32 %v1309, %v967
        %v1317 = vmul.f32 %v1312, %v968
        %v1318 = vmul.f32 %v1315, %v969
        %1319 = vst.msk [vmem:[%s712] sm:$0xff] %vm1198, %v1178
        %1320 = vst.msk [vmem:[%s712 + $0x8] sm:$0xff] %vm1198, %v1179
        %1321 = vst.msk [vmem:[%s712 + $0x10] sm:$0xff] %vm1198, %v1180
        %v1322 = vmax.f32 %v1309, %v1312
        %v1323 = vmax.f32 %v1322, %v1315
        %v1324 = vrot.slane %v1323, 4
        %v1325 = vmax.f32 %v1323, %v1324
        %v1326 = vrot.slane %v1325, 2
        %v1327 = vmax.f32 %v1325, %v1326
        %v1328 = vrot.slane %v1327, 1
        %v1329 = vmax.f32 %v1327, %v1328
        %s1330 = vtos %v1329
        %v1331 = vstv %s1330
        %v1332 = vsub.f32 %v1309, %v1331
        %v1333 = vsub.f32 %v1312, %v1331
        %v1334 = vsub.f32 %v1315, %v1331
        %v1335 = vmul.f32 %v1332, 1.442695
        %v1336 = vpow.pop %v1335
        %v1337 = vmul.f32 %v1333, 1.442695
        %v1338 = vpow.pop %v1337
        %v1339 = vmul.f32 %v1334, 1.442695
        %v1340 = vpow.pop %v1339
        %1344 = vrot.lane.b32.xlu0 %v1316, 32
        %v1345 = vpop.permute.xlu0 %1344
        %1346 = vrot.lane.b32.xlu0 %v1317, 32
        %v1347 = vpop.permute.xlu0 %1346
        %1348 = vrot.lane.b32.xlu0 %v1318, 32
        %v1349 = vpop.permute.xlu0 %1348
        %v1353 = vsel %vm1173, %v1047, %v1345
        %v1354 = vsel %vm1173, %v1052, %v1347
        %v1355 = vsel %vm1173, %v1057, %v1349
        %v1356 = vmul.f32 %v1336, %v1353
        %v1357 = vmul.f32 %v1338, %v1354
        %v1358 = vmul.f32 %v1340, %v1355
        %vm1359 = vcmask 195584
        %v1361 = vsel %vm1359, %v771, 0
        %1363 = vmatprep.subr.mxu0 0.0
        %1364 = vmatpush1.msra.mxu0 0.0
        %1365 = vmatprep.subr.mxu0 0.0
        %1366 = vmatpush1.msra.mxu0 0.0
        %1367 = vmatprep.subr.mxu0 0.0
        %1368 = vmatpush1.msra.mxu0 0.0
        %1369 = vmatprep.subr.mxu0 0.0
        %1370 = vmatpush1.msra.mxu0 0.0
        %1371 = vmatprep.subr.mxu0 0.0
        %1372 = vmatpush1.msra.mxu0 0.0
        %1373 = vmatprep.subr.mxu0 0.0
        %1374 = vmatpush1.msra.mxu0 0.0
        %1375 = vmatprep.subr.mxu0 0.0
        %1376 = vmatpush1.msra.mxu0 0.0
        %1377 = vmatprep.subr.mxu0 0.0
        %1378 = vmatpush1.msra.mxu0 0.0
        %1379 = vmatprep.subr.mxu0 0.0
        %1380 = vmatpush1.msra.mxu0 0.0
        %1381 = vmatprep.subr.mxu0 0.0
        %1382 = vmatpush1.msra.mxu0 0.0
        %1383 = vmatprep.subr.mxu0 0.0
        %1384 = vmatpush1.msra.mxu0 0.0
        %1385 = vmatprep.subr.mxu0 0.0
        %1386 = vmatpush1.msra.mxu0 0.0
        %1387 = vmatprep.subr.mxu0 0.0
        %1388 = vmatpush1.msra.mxu0 0.0
        %1389 = vmatprep.subr.mxu0 0.0
        %1390 = vmatpush1.msra.mxu0 %v1358
        %1391 = vmatprep.subr.mxu0 0.0
        %1392 = vmatpush1.msra.mxu0 %v1357
        %1393 = vmatprep.subr.mxu0 0.0
        %1394 = vmatpush1.msra.mxu0 %v1356
        %1395 = vmatprep.subr.mxu0 0.0
        %1396 = vmatpush2.msra.mxu0 0.0
        %1397 = vmatprep.subr.mxu0 0.0
        %1398 = vmatpush2.msra.mxu0 0.0
        %1399 = vmatprep.subr.mxu0 0.0
        %1400 = vmatpush2.msra.mxu0 0.0
        %1401 = vmatprep.subr.mxu0 0.0
        %1402 = vmatpush2.msra.mxu0 0.0
        %1403 = vmatprep.subr.mxu0 0.0
        %1404 = vmatpush2.msra.mxu0 0.0
        %1405 = vmatprep.subr.mxu0 0.0
        %1406 = vmatpush2.msra.mxu0 0.0
        %1407 = vmatprep.subr.mxu0 0.0
        %1408 = vmatpush2.msra.mxu0 0.0
        %1409 = vmatprep.subr.mxu0 0.0
        %1410 = vmatpush2.msra.mxu0 0.0
        %1411 = vmatprep.subr.mxu0 0.0
        %1412 = vmatpush2.msra.mxu0 0.0
        %1413 = vmatprep.subr.mxu0 0.0
        %1414 = vmatpush2.msra.mxu0 0.0
        %1415 = vmatprep.subr.mxu0 0.0
        %1416 = vmatpush2.msra.mxu0 0.0
        %1417 = vmatprep.subr.mxu0 0.0
        %1418 = vmatpush2.msra.mxu0 0.0
        %1419 = vmatprep.subr.mxu0 0.0
        %1420 = vmatpush2.msra.mxu0 0.0
        %1421 = vmatprep.subr.mxu0 0.0
        %1422 = vmatpush2.msra.mxu0 0.0
        %1423 = vmatprep.subr.mxu0 0.0
        %1424 = vmatpush2.msra.mxu0 0.0
        %1425 = vmatprep.subr.mxu0 0.0
        %1426 = vmatpush2.msra.mxu0 0.0
        %1427 = vmatprep.mubr.f32.mxu0 0.0
        %1428 = vmatmul.mubr.f32.gmra.mxu0 %v1361
        %v1429 = vpop.f32.mrf.mxu0
        %v1430 = vadd.f32 0.0, %v1429
        %v1431 = vpop.f32.mrf.mxu0
        %1432 = vdwg.mxu0
        %1433 = vmatprep.subr.mxu0 0.0
        %1434 = vmatpush1.msra.mxu0 0.0
        %1435 = vmatprep.subr.mxu0 0.0
        %1436 = vmatpush1.msra.mxu0 0.0
        %1437 = vmatprep.subr.mxu0 0.0
        %1438 = vmatpush1.msra.mxu0 0.0
        %1439 = vmatprep.subr.mxu0 0.0
        %1440 = vmatpush1.msra.mxu0 0.0
        %1441 = vmatprep.subr.mxu0 0.0
        %1442 = vmatpush1.msra.mxu0 0.0
        %1443 = vmatprep.subr.mxu0 0.0
        %1444 = vmatpush1.msra.mxu0 0.0
        %1445 = vmatprep.subr.mxu0 0.0
        %1446 = vmatpush1.msra.mxu0 0.0
        %1447 = vmatprep.subr.mxu0 0.0
        %1448 = vmatpush1.msra.mxu0 0.0
        %1449 = vmatprep.subr.mxu0 0.0
        %1450 = vmatpush1.msra.mxu0 0.0
        %1451 = vmatprep.subr.mxu0 0.0
        %1452 = vmatpush1.msra.mxu0 0.0
        %1453 = vmatprep.subr.mxu0 0.0
        %1454 = vmatpush1.msra.mxu0 0.0
        %1455 = vmatprep.subr.mxu0 0.0
        %1456 = vmatpush1.msra.mxu0 0.0
        %1457 = vmatprep.subr.mxu0 0.0
        %1458 = vmatpush1.msra.mxu0 0.0
        %1459 = vmatprep.subr.mxu0 0.0
        %1460 = vmatpush1.msra.mxu0 %v1340
        %1461 = vmatprep.subr.mxu0 0.0
        %1462 = vmatpush1.msra.mxu0 %v1338
        %1463 = vmatprep.subr.mxu0 0.0
        %1464 = vmatpush1.msra.mxu0 %v1336
        %1465 = vmatprep.subr.mxu0 0.0
        %1466 = vmatpush2.msra.mxu0 0.0
        %1467 = vmatprep.subr.mxu0 0.0
        %1468 = vmatpush2.msra.mxu0 0.0
        %1469 = vmatprep.subr.mxu0 0.0
        %1470 = vmatpush2.msra.mxu0 0.0
        %1471 = vmatprep.subr.mxu0 0.0
        %1472 = vmatpush2.msra.mxu0 0.0
        %1473 = vmatprep.subr.mxu0 0.0
        %1474 = vmatpush2.msra.mxu0 0.0
        %1475 = vmatprep.subr.mxu0 0.0
        %1476 = vmatpush2.msra.mxu0 0.0
        %1477 = vmatprep.subr.mxu0 0.0
        %1478 = vmatpush2.msra.mxu0 0.0
        %1479 = vmatprep.subr.mxu0 0.0
        %1480 = vmatpush2.msra.mxu0 0.0
        %1481 = vmatprep.subr.mxu0 0.0
        %1482 = vmatpush2.msra.mxu0 0.0
        %1483 = vmatprep.subr.mxu0 0.0
        %1484 = vmatpush2.msra.mxu0 0.0
        %1485 = vmatprep.subr.mxu0 0.0
        %1486 = vmatpush2.msra.mxu0 0.0
        %1487 = vmatprep.subr.mxu0 0.0
        %1488 = vmatpush2.msra.mxu0 0.0
        %1489 = vmatprep.subr.mxu0 0.0
        %1490 = vmatpush2.msra.mxu0 0.0
        %1491 = vmatprep.subr.mxu0 0.0
        %1492 = vmatpush2.msra.mxu0 0.0
        %1493 = vmatprep.subr.mxu0 0.0
        %1494 = vmatpush2.msra.mxu0 0.0
        %1495 = vmatprep.subr.mxu0 0.0
        %1496 = vmatpush2.msra.mxu0 0.0
        %1497 = vmatprep.mubr.f32.mxu0 0.0
        %1498 = vmatmul.mubr.f32.gmra.mxu0 %v1361
        %v1499 = vpop.f32.mrf.mxu0
        %v1500 = vadd.f32 0.0, %v1499
        %v1501 = vpop.f32.mrf.mxu0
        %1502 = vdwg.mxu0
        %v1503 = vmax.f32 %v1500, 1e-30
        %v1504 = vrcp.pop %v1503
        %v1505 = vmul.f32 1.0, %v1504
        %1507 = vset.pattern.permute.xlu0 0
        %1508 = vperm.xlu0 %1507, %v1505
        %v1509 = vpop.permute.xlu0 %1508
        %v1511 = vmul.f32 %v1430, %v1509
        %1513 = vrot.lane.b32.xlu0 %v845, 48
        %v1514 = vpop.permute.xlu0 %1513
        %vm1516 = vcmask 392192
        %v1517 = vsel %vm1516, %v1511, %v1514
        %v1518 = vld [vmem:[%s741] sm:$0xff]
        %v1519 = vld [vmem:[%s741 + $0x8] sm:$0xff]
        %v1520 = vld [vmem:[%s741 + $0x10] sm:$0xff]
        %v1521 = vld [vmem:[%s741 + $0x18] sm:$0xff]
        %v1522 = vld [vmem:[%s741 + $0x20] sm:$0xff]
        %v1523 = vld [vmem:[%s741 + $0x28] sm:$0xff]
        %v1524 = vld [vmem:[%s741 + $0x30] sm:$0xff]
        %v1525 = vld [vmem:[%s741 + $0x38] sm:$0xff]
        %v1526 = vld [vmem:[%s741 + $0x40] sm:$0xff]
        %v1527 = vld [vmem:[%s741 + $0x48] sm:$0xff]
        %v1528 = vld [vmem:[%s744] sm:$0x1]
        %v1530 = vlaneseq
        %v1531 = vshrl.u32 %v1530, 7
        %v1532 = vsub.s32 0, %v1531
        %v1533 = vrot.slane %v1528, %v1532
        %v1536 = vsel %vm1198, %v1517, 0
        %1538 = vmatprep.subr.mxu0 0.0
        %1539 = vmatpush1.msra.mxu0 0.0
        %1540 = vmatprep.subr.mxu0 0.0
        %1541 = vmatpush1.msra.mxu0 0.0
        %1542 = vmatprep.subr.mxu0 0.0
        %1543 = vmatpush1.msra.mxu0 0.0
        %1544 = vmatprep.subr.mxu0 0.0
        %1545 = vmatpush1.msra.mxu0 0.0
        %1546 = vmatprep.subr.mxu0 0.0
        %1547 = vmatpush1.msra.mxu0 0.0
        %1548 = vmatprep.subr.mxu0 0.0
        %1549 = vmatpush1.msra.mxu0 0.0
        %1550 = vmatprep.subr.mxu0 0.0
        %1551 = vmatpush1.msra.mxu0 %v1527
        %1552 = vmatprep.subr.mxu0 0.0
        %1553 = vmatpush1.msra.mxu0 %v1526
        %1554 = vmatprep.subr.mxu0 0.0
        %1555 = vmatpush1.msra.mxu0 %v1525
        %1556 = vmatprep.subr.mxu0 0.0
        %1557 = vmatpush1.msra.mxu0 %v1524
        %1558 = vmatprep.subr.mxu0 0.0
        %1559 = vmatpush1.msra.mxu0 %v1523
        %1560 = vmatprep.subr.mxu0 0.0
        %1561 = vmatpush1.msra.mxu0 %v1522
        %1562 = vmatprep.subr.mxu0 0.0
        %1563 = vmatpush1.msra.mxu0 %v1521
        %1564 = vmatprep.subr.mxu0 0.0
        %1565 = vmatpush1.msra.mxu0 %v1520
        %1566 = vmatprep.subr.mxu0 0.0
        %1567 = vmatpush1.msra.mxu0 %v1519
        %1568 = vmatprep.subr.mxu0 0.0
        %1569 = vmatpush1.msra.mxu0 %v1518
        %1570 = vmatprep.subr.mxu0 0.0
        %1571 = vmatpush2.msra.mxu0 0.0
        %1572 = vmatprep.subr.mxu0 0.0
        %1573 = vmatpush2.msra.mxu0 0.0
        %1574 = vmatprep.subr.mxu0 0.0
        %1575 = vmatpush2.msra.mxu0 0.0
        %1576 = vmatprep.subr.mxu0 0.0
        %1577 = vmatpush2.msra.mxu0 0.0
        %1578 = vmatprep.subr.mxu0 0.0
        %1579 = vmatpush2.msra.mxu0 0.0
        %1580 = vmatprep.subr.mxu0 0.0
        %1581 = vmatpush2.msra.mxu0 0.0
        %1582 = vmatprep.subr.mxu0 0.0
        %1583 = vmatpush2.msra.mxu0 0.0
        %1584 = vmatprep.subr.mxu0 0.0
        %1585 = vmatpush2.msra.mxu0 0.0
        %1586 = vmatprep.subr.mxu0 0.0
        %1587 = vmatpush2.msra.mxu0 0.0
        %1588 = vmatprep.subr.mxu0 0.0
        %1589 = vmatpush2.msra.mxu0 0.0
        %1590 = vmatprep.subr.mxu0 0.0
        %1591 = vmatpush2.msra.mxu0 0.0
        %1592 = vmatprep.subr.mxu0 0.0
        %1593 = vmatpush2.msra.mxu0 0.0
        %1594 = vmatprep.subr.mxu0 0.0
        %1595 = vmatpush2.msra.mxu0 0.0
        %1596 = vmatprep.subr.mxu0 0.0
        %1597 = vmatpush2.msra.mxu0 0.0
        %1598 = vmatprep.subr.mxu0 0.0
        %1599 = vmatpush2.msra.mxu0 0.0
        %1600 = vmatprep.subr.mxu0 0.0
        %1601 = vmatpush2.msra.mxu0 0.0
        %1602 = vmatprep.mubr.f32.mxu0 0.0
        %1603 = vmatmul.mubr.f32.gmra.mxu0 %v1536
        %v1604 = vpop.f32.mrf.mxu0
        %v1605 = vadd.f32 %v1533, %v1604
        %v1606 = vpop.f32.mrf.mxu0
        %1607 = vdwg.mxu0
        %1608 = vst.msk [vmem:[%s698] sm:$0xff] %vm1173, %v1605
        %v1609 = vld [vmem:[%s752] sm:$0x1]
        %v1611 = vlaneseq
        %v1612 = vshrl.u32 %v1611, 7
        %v1613 = vsub.s32 0, %v1612
        %v1614 = vrot.slane %v1609, %v1613
        %v1616 = vmul.f32 %v1316, %v1614
        %v1617 = vmul.f32 %v1317, %v1614
        %v1618 = vmul.f32 %v1318, %v1614
        %v1619 = vld [vmem:[%s755] sm:$0x1]
        %v1621 = vlaneseq
        %v1622 = vshrl.u32 %v1621, 7
        %v1623 = vsub.s32 0, %v1622
        %v1624 = vrot.slane %v1619, %v1623
        %v1626 = vadd.f32 %v1616, %v1624
        %v1627 = vadd.f32 %v1617, %v1624
        %v1628 = vadd.f32 %v1618, %v1624
        %1629 = vmatprep.subr.mxu0 0.0
        %1630 = vmatpush1.msra.mxu0 0.0
        %1631 = vmatprep.subr.mxu0 0.0
        %1632 = vmatpush1.msra.mxu0 0.0
        %1633 = vmatprep.subr.mxu0 0.0
        %1634 = vmatpush1.msra.mxu0 0.0
        %1635 = vmatprep.subr.mxu0 0.0
        %1636 = vmatpush1.msra.mxu0 0.0
        %1637 = vmatprep.subr.mxu0 0.0
        %1638 = vmatpush1.msra.mxu0 0.0
        %1639 = vmatprep.subr.mxu0 0.0
        %1640 = vmatpush1.msra.mxu0 0.0
        %1641 = vmatprep.subr.mxu0 0.0
        %1642 = vmatpush1.msra.mxu0 0.0
        %1643 = vmatprep.subr.mxu0 0.0
        %1644 = vmatpush1.msra.mxu0 0.0
        %1645 = vmatprep.subr.mxu0 0.0
        %1646 = vmatpush1.msra.mxu0 0.0
        %1647 = vmatprep.subr.mxu0 0.0
        %1648 = vmatpush1.msra.mxu0 0.0
        %1649 = vmatprep.subr.mxu0 0.0
        %1650 = vmatpush1.msra.mxu0 0.0
        %1651 = vmatprep.subr.mxu0 0.0
        %1652 = vmatpush1.msra.mxu0 0.0
        %1653 = vmatprep.subr.mxu0 0.0
        %1654 = vmatpush1.msra.mxu0 0.0
        %1655 = vmatprep.subr.mxu0 0.0
        %1656 = vmatpush1.msra.mxu0 0.0
        %1657 = vmatprep.subr.mxu0 0.0
        %1658 = vmatpush1.msra.mxu0 0.0
        %1659 = vmatprep.subr.mxu0 0.0
        %1660 = vmatpush1.msra.mxu0 %v1605
        %1661 = vmatprep.subr.mxu0 0.0
        %1662 = vmatpush2.msra.mxu0 0.0
        %1663 = vmatprep.subr.mxu0 0.0
        %1664 = vmatpush2.msra.mxu0 0.0
        %1665 = vmatprep.subr.mxu0 0.0
        %1666 = vmatpush2.msra.mxu0 0.0
        %1667 = vmatprep.subr.mxu0 0.0
        %1668 = vmatpush2.msra.mxu0 0.0
        %1669 = vmatprep.subr.mxu0 0.0
        %1670 = vmatpush2.msra.mxu0 0.0
        %1671 = vmatprep.subr.mxu0 0.0
        %1672 = vmatpush2.msra.mxu0 0.0
        %1673 = vmatprep.subr.mxu0 0.0
        %1674 = vmatpush2.msra.mxu0 0.0
        %1675 = vmatprep.subr.mxu0 0.0
        %1676 = vmatpush2.msra.mxu0 0.0
        %1677 = vmatprep.subr.mxu0 0.0
        %1678 = vmatpush2.msra.mxu0 0.0
        %1679 = vmatprep.subr.mxu0 0.0
        %1680 = vmatpush2.msra.mxu0 0.0
        %1681 = vmatprep.subr.mxu0 0.0
        %1682 = vmatpush2.msra.mxu0 0.0
        %1683 = vmatprep.subr.mxu0 0.0
        %1684 = vmatpush2.msra.mxu0 0.0
        %1685 = vmatprep.subr.mxu0 0.0
        %1686 = vmatpush2.msra.mxu0 0.0
        %1687 = vmatprep.subr.mxu0 0.0
        %1688 = vmatpush2.msra.mxu0 0.0
        %1689 = vmatprep.subr.mxu0 0.0
        %1690 = vmatpush2.msra.mxu0 0.0
        %1691 = vmatprep.subr.mxu0 0.0
        %1692 = vmatpush2.msra.mxu0 0.0
        %1693 = vmatprep.mubr.f32.mxu0 0.0
        %1694 = vmatmul.mubr.f32.gmra.mxu0 %v972
        %v1695 = vpop.f32.mrf.mxu0
        %v1696 = vadd.f32 0.0, %v1695
        %v1697 = vpop.f32.mrf.mxu0
        %1698 = vmatprep.mubr.f32.mxu0 0.0
        %1699 = vmatmul.mubr.f32.gmra.mxu0 %v975
        %v1700 = vpop.f32.mrf.mxu0
        %v1701 = vadd.f32 0.0, %v1700
        %v1702 = vpop.f32.mrf.mxu0
        %1703 = vmatprep.mubr.f32.mxu0 0.0
        %1704 = vmatmul.mubr.f32.gmra.mxu0 %v978
        %v1705 = vpop.f32.mrf.mxu0
        %v1706 = vadd.f32 0.0, %v1705
        %v1707 = vpop.f32.mrf.mxu0
        %1708 = vdwg.mxu0
        %1709 = vmatprep.subr.mxu0 0.0
        %1710 = vmatpush1.msra.mxu0 0.0
        %1711 = vmatprep.subr.mxu0 0.0
        %1712 = vmatpush1.msra.mxu0 0.0
        %1713 = vmatprep.subr.mxu0 0.0
        %1714 = vmatpush1.msra.mxu0 0.0
        %1715 = vmatprep.subr.mxu0 0.0
        %1716 = vmatpush1.msra.mxu0 0.0
        %1717 = vmatprep.subr.mxu0 0.0
        %1718 = vmatpush1.msra.mxu0 0.0
        %1719 = vmatprep.subr.mxu0 0.0
        %1720 = vmatpush1.msra.mxu0 0.0
        %1721 = vmatprep.subr.mxu0 0.0
        %1722 = vmatpush1.msra.mxu0 0.0
        %1723 = vmatprep.subr.mxu0 0.0
        %1724 = vmatpush1.msra.mxu0 0.0
        %1725 = vmatprep.subr.mxu0 0.0
        %1726 = vmatpush1.msra.mxu0 0.0
        %1727 = vmatprep.subr.mxu0 0.0
        %1728 = vmatpush1.msra.mxu0 0.0
        %1729 = vmatprep.subr.mxu0 0.0
        %1730 = vmatpush1.msra.mxu0 0.0
        %1731 = vmatprep.subr.mxu0 0.0
        %1732 = vmatpush1.msra.mxu0 0.0
        %1733 = vmatprep.subr.mxu0 0.0
        %1734 = vmatpush1.msra.mxu0 0.0
        %1735 = vmatprep.subr.mxu0 0.0
        %1736 = vmatpush1.msra.mxu0 0.0
        %1737 = vmatprep.subr.mxu0 0.0
        %1738 = vmatpush1.msra.mxu0 0.0
        %1739 = vmatprep.subr.mxu0 0.0
        %1740 = vmatpush1.msra.mxu0 %v1605
        %1741 = vmatprep.subr.mxu0 0.0
        %1742 = vmatpush2.msra.mxu0 0.0
        %1743 = vmatprep.subr.mxu0 0.0
        %1744 = vmatpush2.msra.mxu0 0.0
        %1745 = vmatprep.subr.mxu0 0.0
        %1746 = vmatpush2.msra.mxu0 0.0
        %1747 = vmatprep.subr.mxu0 0.0
        %1748 = vmatpush2.msra.mxu0 0.0
        %1749 = vmatprep.subr.mxu0 0.0
        %1750 = vmatpush2.msra.mxu0 0.0
        %1751 = vmatprep.subr.mxu0 0.0
        %1752 = vmatpush2.msra.mxu0 0.0
        %1753 = vmatprep.subr.mxu0 0.0
        %1754 = vmatpush2.msra.mxu0 0.0
        %1755 = vmatprep.subr.mxu0 0.0
        %1756 = vmatpush2.msra.mxu0 0.0
        %1757 = vmatprep.subr.mxu0 0.0
        %1758 = vmatpush2.msra.mxu0 0.0
        %1759 = vmatprep.subr.mxu0 0.0
        %1760 = vmatpush2.msra.mxu0 0.0
        %1761 = vmatprep.subr.mxu0 0.0
        %1762 = vmatpush2.msra.mxu0 0.0
        %1763 = vmatprep.subr.mxu0 0.0
        %1764 = vmatpush2.msra.mxu0 0.0
        %1765 = vmatprep.subr.mxu0 0.0
        %1766 = vmatpush2.msra.mxu0 0.0
        %1767 = vmatprep.subr.mxu0 0.0
        %1768 = vmatpush2.msra.mxu0 0.0
        %1769 = vmatprep.subr.mxu0 0.0
        %1770 = vmatpush2.msra.mxu0 0.0
        %1771 = vmatprep.subr.mxu0 0.0
        %1772 = vmatpush2.msra.mxu0 0.0
        %1773 = vmatprep.mubr.f32.mxu0 0.0
        %1774 = vmatmul.mubr.f32.gmra.mxu0 %v1061
        %v1775 = vpop.f32.mrf.mxu0
        %v1776 = vadd.f32 0.0, %v1775
        %v1777 = vpop.f32.mrf.mxu0
        %1778 = vmatprep.mubr.f32.mxu0 0.0
        %1779 = vmatmul.mubr.f32.gmra.mxu0 %v1064
        %v1780 = vpop.f32.mrf.mxu0
        %v1781 = vadd.f32 0.0, %v1780
        %v1782 = vpop.f32.mrf.mxu0
        %1783 = vmatprep.mubr.f32.mxu0 0.0
        %1784 = vmatmul.mubr.f32.gmra.mxu0 %v1067
        %v1785 = vpop.f32.mrf.mxu0
        %v1786 = vadd.f32 0.0, %v1785
        %v1787 = vpop.f32.mrf.mxu0
        %1788 = vdwg.mxu0
        %1792 = vrot.lane.b32.xlu0 %v1776, 32
        %v1793 = vpop.permute.xlu0 %1792
        %1794 = vrot.lane.b32.xlu0 %v1781, 32
        %v1795 = vpop.permute.xlu0 %1794
        %1796 = vrot.lane.b32.xlu0 %v1786, 32
        %v1797 = vpop.permute.xlu0 %1796
        %1804 = vrot.lane.b32.xlu0 %v1626, 64
        %v1805 = vpop.permute.xlu0 %1804
        %1806 = vrot.lane.b32.xlu0 %v1627, 64
        %v1807 = vpop.permute.xlu0 %1806
        %1808 = vrot.lane.b32.xlu0 %v1628, 64
        %v1809 = vpop.permute.xlu0 %1808
        %1813 = vrot.lane.b32.xlu0 %v762, 80
        %v1814 = vpop.permute.xlu0 %1813
        %1815 = vrot.lane.b32.xlu0 %v763, 80
        %v1816 = vpop.permute.xlu0 %1815
        %1817 = vrot.lane.b32.xlu0 %v764, 80
        %v1818 = vpop.permute.xlu0 %1817
        %v1822 = vsel %vm1173, %v1696, %v1793
        %v1823 = vsel %vm1173, %v1701, %v1795
        %v1824 = vsel %vm1173, %v1706, %v1797
        %v1825 = vsel %vm1177, %v1822, %v1805
        %v1826 = vsel %vm1177, %v1823, %v1807
        %v1827 = vsel %vm1177, %v1824, %v1809
        %v1828 = vsel %vm1198, %v1825, %v1814
        %v1829 = vsel %vm1198, %v1826, %v1816
        %v1830 = vsel %vm1198, %v1827, %v1818
        %v1831 = vld [vmem:[%s749] sm:$0xff]
        %v1832 = vld [vmem:[%s749 + $0x8] sm:$0xff]
        %v1833 = vld [vmem:[%s749 + $0x10] sm:$0xff]
        %v1834 = vld [vmem:[%s749 + $0x18] sm:$0xff]
        %v1835 = vld [vmem:[%s749 + $0x20] sm:$0xff]
        %v1836 = vld [vmem:[%s749 + $0x28] sm:$0xff]
        %v1837 = vld [vmem:[%s749 + $0x30] sm:$0xff]
        %v1838 = vld [vmem:[%s749 + $0x38] sm:$0xff]
        %v1839 = vld [vmem:[%s749 + $0x40] sm:$0xff]
        %v1840 = vld [vmem:[%s749 + $0x48] sm:$0xff]
        %v1841 = vld [vmem:[%s749 + $0x50] sm:$0xff]
        %v1842 = vld [vmem:[%s749 + $0x58] sm:$0xff]
        %vm1843 = vcmask 785408
        %v1845 = vsel %vm1843, %v1828, 0
        %v1848 = vsel %vm1843, %v1829, 0
        %v1851 = vsel %vm1843, %v1830, 0
        %1853 = vmatprep.subr.mxu0 0.0
        %1854 = vmatpush1.msra.mxu0 0.0
        %1855 = vmatprep.subr.mxu0 0.0
        %1856 = vmatpush1.msra.mxu0 0.0
        %1857 = vmatprep.subr.mxu0 0.0
        %1858 = vmatpush1.msra.mxu0 0.0
        %1859 = vmatprep.subr.mxu0 0.0
        %1860 = vmatpush1.msra.mxu0 0.0
        %1861 = vmatprep.subr.mxu0 0.0
        %1862 = vmatpush1.msra.mxu0 %v1842
        %1863 = vmatprep.subr.mxu0 0.0
        %1864 = vmatpush1.msra.mxu0 %v1841
        %1865 = vmatprep.subr.mxu0 0.0
        %1866 = vmatpush1.msra.mxu0 %v1840
        %1867 = vmatprep.subr.mxu0 0.0
        %1868 = vmatpush1.msra.mxu0 %v1839
        %1869 = vmatprep.subr.mxu0 0.0
        %1870 = vmatpush1.msra.mxu0 %v1838
        %1871 = vmatprep.subr.mxu0 0.0
        %1872 = vmatpush1.msra.mxu0 %v1837
        %1873 = vmatprep.subr.mxu0 0.0
        %1874 = vmatpush1.msra.mxu0 %v1836
        %1875 = vmatprep.subr.mxu0 0.0
        %1876 = vmatpush1.msra.mxu0 %v1835
        %1877 = vmatprep.subr.mxu0 0.0
        %1878 = vmatpush1.msra.mxu0 %v1834
        %1879 = vmatprep.subr.mxu0 0.0
        %1880 = vmatpush1.msra.mxu0 %v1833
        %1881 = vmatprep.subr.mxu0 0.0
        %1882 = vmatpush1.msra.mxu0 %v1832
        %1883 = vmatprep.subr.mxu0 0.0
        %1884 = vmatpush1.msra.mxu0 %v1831
        %1885 = vmatprep.subr.mxu0 0.0
        %1886 = vmatpush2.msra.mxu0 0.0
        %1887 = vmatprep.subr.mxu0 0.0
        %1888 = vmatpush2.msra.mxu0 0.0
        %1889 = vmatprep.subr.mxu0 0.0
        %1890 = vmatpush2.msra.mxu0 0.0
        %1891 = vmatprep.subr.mxu0 0.0
        %1892 = vmatpush2.msra.mxu0 0.0
        %1893 = vmatprep.subr.mxu0 0.0
        %1894 = vmatpush2.msra.mxu0 0.0
        %1895 = vmatprep.subr.mxu0 0.0
        %1896 = vmatpush2.msra.mxu0 0.0
        %1897 = vmatprep.subr.mxu0 0.0
        %1898 = vmatpush2.msra.mxu0 0.0
        %1899 = vmatprep.subr.mxu0 0.0
        %1900 = vmatpush2.msra.mxu0 0.0
        %1901 = vmatprep.subr.mxu0 0.0
        %1902 = vmatpush2.msra.mxu0 0.0
        %1903 = vmatprep.subr.mxu0 0.0
        %1904 = vmatpush2.msra.mxu0 0.0
        %1905 = vmatprep.subr.mxu0 0.0
        %1906 = vmatpush2.msra.mxu0 0.0
        %1907 = vmatprep.subr.mxu0 0.0
        %1908 = vmatpush2.msra.mxu0 0.0
        %1909 = vmatprep.subr.mxu0 0.0
        %1910 = vmatpush2.msra.mxu0 0.0
        %1911 = vmatprep.subr.mxu0 0.0
        %1912 = vmatpush2.msra.mxu0 0.0
        %1913 = vmatprep.subr.mxu0 0.0
        %1914 = vmatpush2.msra.mxu0 0.0
        %1915 = vmatprep.subr.mxu0 0.0
        %1916 = vmatpush2.msra.mxu0 0.0
        %1917 = vmatprep.mubr.f32.mxu0 0.0
        %1918 = vmatmul.mubr.f32.gmra.mxu0 %v1845
        %v1919 = vpop.f32.mrf.mxu0
        %v1920 = vadd.f32 0.0, %v1919
        %v1921 = vpop.f32.mrf.mxu0
        %1922 = vmatprep.mubr.f32.mxu0 0.0
        %1923 = vmatmul.mubr.f32.gmra.mxu0 %v1848
        %v1924 = vpop.f32.mrf.mxu0
        %v1925 = vadd.f32 0.0, %v1924
        %v1926 = vpop.f32.mrf.mxu0
        %1927 = vmatprep.mubr.f32.mxu0 0.0
        %1928 = vmatmul.mubr.f32.gmra.mxu0 %v1851
        %v1929 = vpop.f32.mrf.mxu0
        %v1930 = vadd.f32 0.0, %v1929
        %v1931 = vpop.f32.mrf.mxu0
        %1932 = vdwg.mxu0
        %1933 = vst.msk [vmem:[%s760] sm:$0xff] %vm774, %v1920
        %1934 = vst.msk [vmem:[%s760 + $0x8] sm:$0xff] %vm774, %v1925
        %1935 = vst.msk [vmem:[%s760 + $0x10] sm:$0xff] %vm774, %v1930
        %s1936 = sand.u32 %s435, 1
        %s1937 = scalar_lea.sflag [#allocation3], %s1936
        %s1938 = sand.u32 %s435, 1
        %s1939 = smul.addr %s1938, 8
        %s1940 = scalar_lea.vmem [#allocation2], %s1939
        %p1941 = scmp.lt.s32.totalorder %s36, 1
        %s1942 = scalar_select %p1941, %s36, 1
        %s1943 = smul.addr %s1942, 3
        %s1944 = smul.addr %s1943, 8
        %s1945 = scalar_lea.vmem %s17, %s1944
        %s1946 = sand.u32 %s487, 1
        %s1947 = scalar_lea.sflag [#allocation5], %s1946
        %s1948 = sand.u32 %s487, 1
        %s1949 = smul.addr %s1948, 24
        %s1950 = scalar_lea.vmem [#allocation4], %s1949
        // Predicated region
        $region85: #{tpu_custom_call.1} parent=83 // pred_check
          %p1951 = pneg %p445
        $region86: #{tpu_custom_call.1} parent=83 // pred_check_branch
          %1953 = sbr.rel (%p1951) target = $region88
        $region87: #{tpu_custom_call.1} parent=83 // pred_region
          %s1955 = ssub.s32 128, 128
          %1956 = vsyncadd %s1937, %s1955
          %s1957 = smul.addr %s36, 128
          %s1958 = scalar_lea.hbm %s16, %s1957
          %s1960 = sshll.u32 %s1940, 4
          %s1961 = int_to_ptr.vmem [resolvable:$true] %s1960
          %1963 = dma.vmem_to_hbm [thread:$0]  %s1961, 128, %s1958, %s1937
        $region88: #{tpu_custom_call.1} parent=83 // pred_fallthru
          _
        // Predicated region
        $region89: #{tpu_custom_call.1} parent=83 // pred_check
          %p1964 = pneg %p471
        $region90: #{tpu_custom_call.1} parent=83 // pred_check_branch
          %1966 = sbr.rel (%p1964) target = $region92
        $region91: #{tpu_custom_call.1} parent=83 // pred_region
          _
        $region92: #{tpu_custom_call.1} parent=83 // pred_fallthru
          _
        // Predicated region
        $region93: #{tpu_custom_call.1} parent=83 // pred_check
          %p1967 = pneg %p497
        $region94: #{tpu_custom_call.1} parent=83 // pred_check_branch
          %1969 = sbr.rel (%p1967) target = $region96
        $region95: #{tpu_custom_call.1} parent=83 // pred_region
          %s1971 = ssub.s32 384, 384
          %1972 = vsyncadd %s1947, %s1971
          %s1973 = smul.addr %s36, 3
          %s1974 = smul.addr %s1973, 128
          %s1975 = scalar_lea.hbm %s18, %s1974
          %s1976 = sshll.u32 %s1950, 4
          %s1977 = int_to_ptr.vmem [resolvable:$true] %s1976
          %1982 = dma.vmem_to_hbm [thread:$0]  %s1977, 384, %s1975, %s1947, 128, 128, 8
        $region96: #{tpu_custom_call.1} parent=83 // pred_fallthru
          _
      $region84: #{tpu_custom_call.1} parent=5 // pred_fallthru
        _
      %p1983 = scmp.le.s32.totalorder 2, %s31
      // Predicated region
      $region97: #{tpu_custom_call.1} parent=5 // pred_check
        %p1984 = pneg %p1983
      $region98: #{tpu_custom_call.1} parent=5 // pred_check_branch
        %1986 = sbr.rel (%p1984) target = $region100
      $region99: #{tpu_custom_call.1} parent=5 // pred_region
        %s1987 = ssub.s32 %s31, 2
        // Predicated region
        $region101: #{tpu_custom_call.1} parent=99 // pred_check
          %p1988 = pneg %p451
        $region102: #{tpu_custom_call.1} parent=99 // pred_check_branch
          %1990 = sbr.rel (%p1988) target = $region104
        $region103: #{tpu_custom_call.1} parent=99 // pred_region
          %s1991 = sand.u32 %s436, 1
          %s1992 = scalar_lea.sflag [#allocation3], %s1991
          %s1993 = sand.u32 %s436, 1
          %s1994 = smul.addr %s1993, 8
          %s1995 = scalar_lea.vmem [#allocation2], %s1994
          %1996 = dma.done %s1992, 128
        $region104: #{tpu_custom_call.1} parent=99 // pred_fallthru
          _
        // Predicated region
        $region105: #{tpu_custom_call.1} parent=99 // pred_check
          %p1997 = pneg %p477
        $region106: #{tpu_custom_call.1} parent=99 // pred_check_branch
          %1999 = sbr.rel (%p1997) target = $region108
        $region107: #{tpu_custom_call.1} parent=99 // pred_region
          %p2000 = scmp.lt.s32.totalorder %s37, 1
          %s2001 = scalar_select %p2000, %s37, 1
          %s2002 = smul.addr %s2001, 3
          %s2003 = smul.addr %s2002, 8
          %s2004 = scalar_lea.vmem %s17, %s2003
        $region108: #{tpu_custom_call.1} parent=99 // pred_fallthru
          _
        // Predicated region
        $region109: #{tpu_custom_call.1} parent=99 // pred_check
          %p2005 = pneg %p503
        $region110: #{tpu_custom_call.1} parent=99 // pred_check_branch
          %2007 = sbr.rel (%p2005) target = $region112
        $region111: #{tpu_custom_call.1} parent=99 // pred_region
          %s2008 = sand.u32 %s488, 1
          %s2009 = scalar_lea.sflag [#allocation5], %s2008
          %s2010 = sand.u32 %s488, 1
          %s2011 = smul.addr %s2010, 24
          %s2012 = scalar_lea.vmem [#allocation4], %s2011
          %2013 = dma.done %s2009, 384
        $region112: #{tpu_custom_call.1} parent=99 // pred_fallthru
          _
      $region100: #{tpu_custom_call.1} parent=5 // pred_fallthru
        _
    $region6: #{tpu_custom_call.1} parent=1 // loop_footer
      %s35 = sadd.s32 1, %s31
    $region7: #{tpu_custom_call.1} parent=1 // loop_footer_branch
      %30 = sbr.rel target = $region3
    $region8: #{tpu_custom_call.1} parent=1 // loop_exit
      _
    %2014 = vsyncpa [#allocation3], 1
    %s2015 = scalar_lea.sflag [#allocation3], 1
    %2016 = vsyncpa %s2015, 1
    %2017 = vsyncpa [#allocation5], 1
    %s2018 = scalar_lea.sflag [#allocation5], 1
    %2019 = vsyncpa %s2018, 1

</llo_original>
